<compile_context>
chip_gen: v5e
topology: v5e:2x2
jax: 0.10.0
libtpu: 0.0.40
codegen_flags: <defaults>
</compile_context>

<pallas_src>
import jax
import jax.numpy as jnp
from jax.experimental import pallas as pl
from jax.experimental.pallas import tpu as pltpu


NUM_FEATURES = 96
HIDDEN_LAYERS = [1024, 512, 128]
NUM_CLASSES = 15
LEAKY_SLOPE = 0.1

K_PAD = 128      # padded input-feature dim (96 -> 128): full MXU contraction tile on layer 1
OUT_PAD = 128    # padded logits dim (15 -> 128): lane-dense unmasked stores on the write path
TB_MAX = 1024    # max batch-tile rows per grid step
MIN_TB = 16      # bf16 sublane packing for the streamed x tile


def _fc_block(h_bf16, w_ref, b_ref):
    """Linear (bf16 MXU operands, f32 acc) + f32 bias + bf16 LeakyReLU(0.1)."""
    acc = jnp.dot(h_bf16, w_ref[...], preferred_element_type=jnp.float32) + b_ref[...]
    hb = acc.astype(jnp.bfloat16)
    # maximum(h, 0.1*h) == LeakyReLU(0.1)(h) exactly for slope in (0, 1)
    return jnp.maximum(hb, LEAKY_SLOPE * hb)


def mlp_kernel(x_ref,
               w1_ref, b1_ref,
               w2_ref, b2_ref,
               w3_ref, b3_ref,
               w4_ref, b4_ref,
               out_ref):
    """One batch tile of the MLP: 4 bf16 MXU matmuls (f32 acc) + bias/LeakyReLU epilogues."""
    h = x_ref[...]                                   # bf16 (tb, 128)
    h = _fc_block(h, w1_ref, b1_ref)                 # (tb, 1024) bf16
    h = _fc_block(h, w2_ref, b2_ref)                 # (tb, 512)  bf16
    h = _fc_block(h, w3_ref, b3_ref)                 # (tb, 128)  bf16
    logits = jnp.dot(h, w4_ref[...], preferred_element_type=jnp.float32) + b4_ref[...]
    out_ref[...] = logits.astype(out_ref.dtype)      # (tb, 128) f32


def prepare_kernel_params(params):
    """Pad + cast the logical f32 (in, out) params into the kernel's resident layout.

    Weights -> bf16 (MXU operands), biases -> f32 (elementwise path). Padded rows/cols
    are zero so the padded matmuls are numerically exact.
    """
    (w1, b1), (w2, b2), (w3, b3), (w4, b4) = params

    w1p = jnp.zeros((K_PAD, w1.shape[1]), jnp.float32).at[: w1.shape[0], :].set(w1)
    w1p = w1p.astype(jnp.bfloat16)
    w2p = w2.astype(jnp.bfloat16)
    w3p = w3.astype(jnp.bfloat16)
    w4p = jnp.zeros((w4.shape[0], OUT_PAD), jnp.float32).at[:, : w4.shape[1]].set(w4)
    w4p = w4p.astype(jnp.bfloat16)
    b4p = jnp.zeros((1, OUT_PAD), jnp.float32).at[:, : b4.shape[1]].set(b4)

    return (w1p, b1.astype(jnp.float32),
            w2p, b2.astype(jnp.float32),
            w3p, b3.astype(jnp.float32),
            w4p, b4p)


def _choose_batch_tile(B):
    """Pick (tb, n_tiles, b_pad): adaptive tile, >=2 tiles when there's enough batch."""
    b_round = ((B + MIN_TB - 1) // MIN_TB) * MIN_TB
    tb = min(TB_MAX, b_round)
    if b_round >= 2 * MIN_TB and b_round <= tb:
        # Whole batch would be a single grid tile: split it so the "parallel"
        # batch axis can occupy both TensorCores on v7x.
        tb = ((b_round // 2 + MIN_TB - 1) // MIN_TB) * MIN_TB
    n_tiles = pl.cdiv(B, tb)
    return tb, n_tiles, n_tiles * tb


def classifier_forward(x, params):
    """Pallas forward: pads batch/features, runs the gridded kernel, slices logits."""
    B = x.shape[0]
    w1p, b1, w2p, b2, w3p, b3, w4p, b4p = prepare_kernel_params(params)

    tb, n_tiles, b_pad = _choose_batch_tile(B)

    # Fused pad+cast: batch -> tile multiple, features 96 -> 128, in bf16 (exact:
    # the padded w1 rows are zero; padded batch rows are sliced off below).
    x_p = jnp.pad(x.astype(jnp.bfloat16),
                  ((0, b_pad - B), (0, K_PAD - NUM_FEATURES)))

    def resident(arr):
        # whole-array block whose index never changes -> stays in VMEM across the grid
        return pl.BlockSpec(arr.shape, lambda i: (0, 0))

    out_padded = pl.pallas_call(
        mlp_kernel,
        out_shape=jax.ShapeDtypeStruct((b_pad, OUT_PAD), jnp.float32),
        grid=(n_tiles,),
        in_specs=[
            pl.BlockSpec((tb, K_PAD), lambda i: (i, 0)),   # bf16 x tile, double-buffered
            resident(w1p), resident(b1),
            resident(w2p), resident(b2),
            resident(w3p), resident(b3),
            resident(w4p), resident(b4p),
        ],
        out_specs=pl.BlockSpec((tb, OUT_PAD), lambda i: (i, 0)),
        compiler_params=pltpu.CompilerParams(
            dimension_semantics=("parallel",),   # shard batch tiles across TCs on v7x
            vmem_limit_bytes=32 << 20,           # ~13 MiB peak at tb=1024, ample headroom
        ),
    )(x_p, w1p, b1, w2p, b2, w3p, b3, w4p, b4p)

    return out_padded[:B, :NUM_CLASSES]


def init_params(key):
    """Deterministic f32 params (uniform +-1/sqrt(fan_in), like PyTorch Linear default)."""
    dims = [NUM_FEATURES] + HIDDEN_LAYERS + [NUM_CLASSES]
    params = []
    for i in range(len(dims) - 1):
        fan_in, fan_out = dims[i], dims[i + 1]
        key, kw, kb = jax.random.split(key, 3)
        bound = 1.0 / (fan_in ** 0.5)
        w = jax.random.uniform(kw, (fan_in, fan_out), jnp.float32, -bound, bound)
        # biases kept 2-D (1, out) so they broadcast across the batch (sublane) axis
        b = jax.random.uniform(kb, (1, fan_out), jnp.float32, -bound, bound)
        params.append((w, b))
    return params


def reference_forward_f32(x, params):
    """Pure-f32 JAX reference (module semantics)."""
    h = x
    for i, (w, b) in enumerate(params):
        h = h @ w + b
        if i < len(params) - 1:
            h = jnp.where(h > 0, h, LEAKY_SLOPE * h)
    return h


def reference_forward_bf16(x, params):
    """JAX reference matching the kernel's bf16-operand / f32-acc / bf16-epilogue numerics."""
    w1p, b1, w2p, b2, w3p, b3, w4p, b4p = prepare_kernel_params(params)
    h = jnp.pad(x.astype(jnp.bfloat16), ((0, 0), (0, K_PAD - NUM_FEATURES)))

    def block(h_bf16, w, b):
        acc = jnp.dot(h_bf16, w, preferred_element_type=jnp.float32) + b
        hb = acc.astype(jnp.bfloat16)
        return jnp.maximum(hb, LEAKY_SLOPE * hb)

    h = block(h, w1p, b1)
    h = block(h, w2p, b2)
    h = block(h, w3p, b3)
    y = jnp.dot(h, w4p, preferred_element_type=jnp.float32) + b4p
    return y[:, :NUM_CLASSES]


# TODO(synk): training utilities of the PyTorch module (Adam step, CE loss, checkpoint
# bookkeeping) are host-side code, not part of the forward pass, and are not ported.


if __name__ == "__main__":
    key = jax.random.PRNGKey(0)
    key, kx = jax.random.split(key)

    batch = 8
    x = jax.random.normal(kx, (batch, NUM_FEATURES), jnp.float32)

    params = init_params(key)

    logits = classifier_forward(x, params)
    jax.block_until_ready(logits)

    assert logits.shape == (batch, NUM_CLASSES)

    # exact-path check (same bf16/f32 numerics as the kernel)
    ref_bf16 = reference_forward_bf16(x, params)
    assert jnp.allclose(logits, ref_bf16, atol=2e-3, rtol=2e-3), \
        "mismatch vs bf16-path JAX reference"

    # semantic check vs the pure-f32 module math (loose tol for bf16 operands)
    ref_f32 = reference_forward_f32(x, params)
    assert jnp.allclose(logits, ref_f32, atol=7.5e-2, rtol=7.5e-2), \
        "mismatch vs f32 JAX reference"

    print("KERNEL_OK")
</pallas_src>

<mosaic_0001>
module attributes {stable_mosaic.version = 11 : i64} {
  func.func @mlp_kernel(%arg0: i32, %arg1: memref<16x128xbf16, #tpu.memory_space<vmem>>, %arg2: memref<128x1024xbf16, #tpu.memory_space<vmem>>, %arg3: memref<1x1024xf32, #tpu.memory_space<vmem>>, %arg4: memref<1024x512xbf16, #tpu.memory_space<vmem>>, %arg5: memref<1x512xf32, #tpu.memory_space<vmem>>, %arg6: memref<512x128xbf16, #tpu.memory_space<vmem>>, %arg7: memref<1x128xf32, #tpu.memory_space<vmem>>, %arg8: memref<128x128xbf16, #tpu.memory_space<vmem>>, %arg9: memref<1x128xf32, #tpu.memory_space<vmem>>, %arg10: memref<16x128xf32, #tpu.memory_space<vmem>>) attributes {dimension_semantics = [#tpu.dimension_semantics<parallel>], iteration_bounds = array<i64: 1>, scalar_prefetch = 0 : i64, scratch_operands = 0 : i64, tpu.core_type = #tpu.core_type<tc>, window_params = [{transform_indices = @transform_0, window_bounds = array<i64: 16, 128>}, {pipeline_mode = #tpu.pipeline_mode<synchronous>, transform_indices = @transform_1, window_bounds = array<i64: 128, 1024>}, {pipeline_mode = #tpu.pipeline_mode<synchronous>, transform_indices = @transform_2, window_bounds = array<i64: 1, 1024>}, {pipeline_mode = #tpu.pipeline_mode<synchronous>, transform_indices = @transform_3, window_bounds = array<i64: 1024, 512>}, {pipeline_mode = #tpu.pipeline_mode<synchronous>, transform_indices = @transform_4, window_bounds = array<i64: 1, 512>}, {pipeline_mode = #tpu.pipeline_mode<synchronous>, transform_indices = @transform_5, window_bounds = array<i64: 512, 128>}, {pipeline_mode = #tpu.pipeline_mode<synchronous>, transform_indices = @transform_6, window_bounds = array<i64: 1, 128>}, {pipeline_mode = #tpu.pipeline_mode<synchronous>, transform_indices = @transform_7, window_bounds = array<i64: 128, 128>}, {pipeline_mode = #tpu.pipeline_mode<synchronous>, transform_indices = @transform_8, window_bounds = array<i64: 1, 128>}, {transform_indices = @transform_9, window_bounds = array<i64: 16, 128>}]} {
    %c0 = arith.constant 0 : index
    %c0_0 = arith.constant 0 : index
    %0 = vector.load %arg1[%c0, %c0_0] : memref<16x128xbf16, #tpu.memory_space<vmem>>, vector<16x128xbf16>
    %c0_1 = arith.constant 0 : index
    %c0_2 = arith.constant 0 : index
    %1 = vector.load %arg2[%c0_1, %c0_2] : memref<128x1024xbf16, #tpu.memory_space<vmem>>, vector<128x1024xbf16>
    %cst = arith.constant dense<0.000000e+00> : vector<16x1024xf32>
    %2 = tpu.matmul %0, %1, %cst {dimension_numbers = #tpu.dot_dimension_numbers<[1], [0], [0], [1], [0, 0, 1, 1], [], []>} : vector<16x128xbf16>, vector<128x1024xbf16>, vector<16x1024xf32> -> vector<16x1024xf32>
    %c0_3 = arith.constant 0 : index
    %c0_4 = arith.constant 0 : index
    %3 = vector.load %arg3[%c0_3, %c0_4] : memref<1x1024xf32, #tpu.memory_space<vmem>>, vector<1x1024xf32>
    %4 = vector.broadcast %3 : vector<1x1024xf32> to vector<16x1024xf32>
    %5 = arith.addf %2, %4 : vector<16x1024xf32>
    %6 = arith.truncf %5 : vector<16x1024xf32> to vector<16x1024xbf16>
    %cst_5 = arith.constant 1.000980e-01 : bf16
    %7 = vector.broadcast %cst_5 : bf16 to vector<16x1024xbf16>
    %8 = arith.mulf %7, %6 : vector<16x1024xbf16>
    %9 = arith.maximumf %6, %8 : vector<16x1024xbf16>
    %c0_6 = arith.constant 0 : index
    %c0_7 = arith.constant 0 : index
    %10 = vector.load %arg4[%c0_6, %c0_7] : memref<1024x512xbf16, #tpu.memory_space<vmem>>, vector<1024x512xbf16>
    %cst_8 = arith.constant dense<0.000000e+00> : vector<16x512xf32>
    %11 = tpu.matmul %9, %10, %cst_8 {dimension_numbers = #tpu.dot_dimension_numbers<[1], [0], [0], [1], [0, 0, 1, 1], [], []>} : vector<16x1024xbf16>, vector<1024x512xbf16>, vector<16x512xf32> -> vector<16x512xf32>
    %c0_9 = arith.constant 0 : index
    %c0_10 = arith.constant 0 : index
    %12 = vector.load %arg5[%c0_9, %c0_10] : memref<1x512xf32, #tpu.memory_space<vmem>>, vector<1x512xf32>
    %13 = vector.broadcast %12 : vector<1x512xf32> to vector<16x512xf32>
    %14 = arith.addf %11, %13 : vector<16x512xf32>
    %15 = arith.truncf %14 : vector<16x512xf32> to vector<16x512xbf16>
    %cst_11 = arith.constant 1.000980e-01 : bf16
    %16 = vector.broadcast %cst_11 : bf16 to vector<16x512xbf16>
    %17 = arith.mulf %16, %15 : vector<16x512xbf16>
    %18 = arith.maximumf %15, %17 : vector<16x512xbf16>
    %c0_12 = arith.constant 0 : index
    %c0_13 = arith.constant 0 : index
    %19 = vector.load %arg6[%c0_12, %c0_13] : memref<512x128xbf16, #tpu.memory_space<vmem>>, vector<512x128xbf16>
    %cst_14 = arith.constant dense<0.000000e+00> : vector<16x128xf32>
    %20 = tpu.matmul %18, %19, %cst_14 {dimension_numbers = #tpu.dot_dimension_numbers<[1], [0], [0], [1], [0, 0, 1, 1], [], []>} : vector<16x512xbf16>, vector<512x128xbf16>, vector<16x128xf32> -> vector<16x128xf32>
    %c0_15 = arith.constant 0 : index
    %c0_16 = arith.constant 0 : index
    %21 = vector.load %arg7[%c0_15, %c0_16] : memref<1x128xf32, #tpu.memory_space<vmem>>, vector<1x128xf32>
    %22 = vector.broadcast %21 : vector<1x128xf32> to vector<16x128xf32>
    %23 = arith.addf %20, %22 : vector<16x128xf32>
    %24 = arith.truncf %23 : vector<16x128xf32> to vector<16x128xbf16>
    %cst_17 = arith.constant 1.000980e-01 : bf16
    %25 = vector.broadcast %cst_17 : bf16 to vector<16x128xbf16>
    %26 = arith.mulf %25, %24 : vector<16x128xbf16>
    %27 = arith.maximumf %24, %26 : vector<16x128xbf16>
    %c0_18 = arith.constant 0 : index
    %c0_19 = arith.constant 0 : index
    %28 = vector.load %arg8[%c0_18, %c0_19] : memref<128x128xbf16, #tpu.memory_space<vmem>>, vector<128x128xbf16>
    %cst_20 = arith.constant dense<0.000000e+00> : vector<16x128xf32>
    %29 = tpu.matmul %27, %28, %cst_20 {dimension_numbers = #tpu.dot_dimension_numbers<[1], [0], [0], [1], [0, 0, 1, 1], [], []>} : vector<16x128xbf16>, vector<128x128xbf16>, vector<16x128xf32> -> vector<16x128xf32>
    %c0_21 = arith.constant 0 : index
    %c0_22 = arith.constant 0 : index
    %30 = vector.load %arg9[%c0_21, %c0_22] : memref<1x128xf32, #tpu.memory_space<vmem>>, vector<1x128xf32>
    %31 = vector.broadcast %30 : vector<1x128xf32> to vector<16x128xf32>
    %32 = arith.addf %29, %31 : vector<16x128xf32>
    %c0_23 = arith.constant 0 : index
    %c0_24 = arith.constant 0 : index
    %33 = vector.load %arg10[%c0_23, %c0_24] : memref<16x128xf32, #tpu.memory_space<vmem>>, vector<16x128xf32>
    tpu.vector_store %arg10[%c0_23, %c0_24], %32 {strides = array<i32>} : memref<16x128xf32, #tpu.memory_space<vmem>>, vector<16x128xf32>,
    return
  }
  func.func @transform_0(%arg0: i32) -> (i32, i32) {
    %c0_i32 = arith.constant 0 : i32
    %c0_i32_0 = arith.constant 0 : i32
    return %arg0, %c0_i32 : i32, i32
  }
  func.func @transform_1(%arg0: i32) -> (i32, i32) {
    %c0_i32 = arith.constant 0 : i32
    %c0_i32_0 = arith.constant 0 : i32
    %c0_i32_1 = arith.constant 0 : i32
    return %c0_i32, %c0_i32_0 : i32, i32
  }
  func.func @transform_2(%arg0: i32) -> (i32, i32) {
    %c0_i32 = arith.constant 0 : i32
    %c0_i32_0 = arith.constant 0 : i32
    %c0_i32_1 = arith.constant 0 : i32
    return %c0_i32, %c0_i32_0 : i32, i32
  }
  func.func @transform_3(%arg0: i32) -> (i32, i32) {
    %c0_i32 = arith.constant 0 : i32
    %c0_i32_0 = arith.constant 0 : i32
    %c0_i32_1 = arith.constant 0 : i32
    return %c0_i32, %c0_i32_0 : i32, i32
  }
  func.func @transform_4(%arg0: i32) -> (i32, i32) {
    %c0_i32 = arith.constant 0 : i32
    %c0_i32_0 = arith.constant 0 : i32
    %c0_i32_1 = arith.constant 0 : i32
    return %c0_i32, %c0_i32_0 : i32, i32
  }
  func.func @transform_5(%arg0: i32) -> (i32, i32) {
    %c0_i32 = arith.constant 0 : i32
    %c0_i32_0 = arith.constant 0 : i32
    %c0_i32_1 = arith.constant 0 : i32
    return %c0_i32, %c0_i32_0 : i32, i32
  }
  func.func @transform_6(%arg0: i32) -> (i32, i32) {
    %c0_i32 = arith.constant 0 : i32
    %c0_i32_0 = arith.constant 0 : i32
    %c0_i32_1 = arith.constant 0 : i32
    return %c0_i32, %c0_i32_0 : i32, i32
  }
  func.func @transform_7(%arg0: i32) -> (i32, i32) {
    %c0_i32 = arith.constant 0 : i32
    %c0_i32_0 = arith.constant 0 : i32
    %c0_i32_1 = arith.constant 0 : i32
    return %c0_i32, %c0_i32_0 : i32, i32
  }
  func.func @transform_8(%arg0: i32) -> (i32, i32) {
    %c0_i32 = arith.constant 0 : i32
    %c0_i32_0 = arith.constant 0 : i32
    %c0_i32_1 = arith.constant 0 : i32
    return %c0_i32, %c0_i32_0 : i32, i32
  }
  func.func @transform_9(%arg0: i32) -> (i32, i32) {
    %c0_i32 = arith.constant 0 : i32
    %c0_i32_0 = arith.constant 0 : i32
    return %arg0, %c0_i32 : i32, i32
  }
}

</mosaic_0001>

<llo_original>
// kernel: tpu_custom_call.1
$region0: #{tpu_custom_call.1}
  #allocation0 [shape = 'u32[]', space=smem, size = 0x4, offset = 0x4, fixed_abs, tag = 'smem constant byte address 0x4 - core index']
  #allocation1 [shape = 'u32[72,128]{1,0:T(1,128)}', space=vmem, size = 0x9000, scoped, tag = 'internal scratch']
  %s0 = inlined_call_operand.hbm [shape: bf16[16,128], index: 0, kind: input, shape index: {}]
  %s1 = inlined_call_operand.hbm [shape: bf16[128,1024], index: 1, kind: input, shape index: {}]
  %s2 = inlined_call_operand.hbm [shape: f32[1,1024], index: 2, kind: input, shape index: {}]
  %s3 = inlined_call_operand.hbm [shape: bf16[1024,512], index: 3, kind: input, shape index: {}]
  %s4 = inlined_call_operand.hbm [shape: f32[1,512], index: 4, kind: input, shape index: {}]
  %s5 = inlined_call_operand.hbm [shape: bf16[512,128], index: 5, kind: input, shape index: {}]
  %s6 = inlined_call_operand.vmem [shape: f32[1,128], index: 6, kind: input, shape index: {}]
  %s7 = inlined_call_operand.hbm [shape: bf16[128,128], index: 7, kind: input, shape index: {}]
  %s8 = inlined_call_operand.vmem [shape: f32[1,128], index: 8, kind: input, shape index: {}]
  %s9 = inlined_call_operand.hbm [shape: f32[16,128], index: 9, kind: output, shape index: {}]
  %s10 = sld [smem:[#allocation0]]
  $region74: #{tpu_custom_call.1} parent=0
    _
  %s12 = ssub.s32 1, %s10
  %s13 = scalar_select 0, %s12, %s10
  $region1: #{tpu_custom_call.1} parent=0
    #allocation2 [shape = 'u8[4096]{0}', space=vmem, size = 0x1000, scoped, tag = 'input window, operand 0, single buffered']
    #allocation3 [shape = 's32[1]{0}', space=sflag, size = 0x4, scoped, tag = 'scoped memory for tpu_custom_call.1']
    #allocation4 [shape = 's32[1]{0}', space=sflag, size = 0x4, scoped, tag = 'scoped memory for tpu_custom_call.1']
    #allocation5 [shape = 'u8[262144]{0}', space=vmem, size = 0x40000, scoped, tag = 'input window, operand 1, single buffered']
    #allocation6 [shape = 's32[1]{0}', space=sflag, size = 0x4, scoped, tag = 'scoped memory for tpu_custom_call.1']
    #allocation7 [shape = 'u8[4096]{0}', space=vmem, size = 0x1000, scoped, tag = 'input window, operand 2, single buffered']
    #allocation8 [shape = 'u8[1048576]{0}', space=vmem, size = 0x100000, scoped, tag = 'input window, operand 3, single buffered']
    #allocation9 [shape = 's32[1]{0}', space=sflag, size = 0x4, scoped, tag = 'scoped memory for tpu_custom_call.1']
    #allocation10 [shape = 'u8[2048]{0}', space=vmem, size = 0x800, scoped, tag = 'input window, operand 4, single buffered']
    #allocation11 [shape = 'u8[131072]{0}', space=vmem, size = 0x20000, scoped, tag = 'input window, operand 5, single buffered']
    #allocation12 [shape = 's32[1]{0}', space=sflag, size = 0x4, scoped, tag = 'scoped memory for tpu_custom_call.1']
    #allocation13 [shape = 'u8[32768]{0}', space=vmem, size = 0x8000, scoped, tag = 'input window, operand 7, single buffered']
    #allocation14 [shape = 'u8[8192]{0}', space=vmem, size = 0x2000, scoped, tag = 'output window, operand 0, single buffered']
    %14 = vsyncpa [#allocation3], 0
    %15 = vsyncpa [#allocation6], 0
    %16 = vsyncpa [#allocation9], 0
    %17 = vsyncpa [#allocation12], 0
    %18 = vsyncpa [#allocation4], 0
    // Predicated region
    $region2: #{tpu_custom_call.1} parent=1 // pred_check
      _
    $region3: #{tpu_custom_call.1} parent=1 // pred_check_branch
      %20 = sbr.rel (0) target = $region5
    $region4: #{tpu_custom_call.1} parent=1 // pred_region
      %22 = vsyncadd [#allocation3], 0
      %s23 = sshll.u32 %s0, 4
      %s24 = int_to_ptr.hbm [resolvable:$true] %s23
      %s25 = sshll.u32 [#allocation2], 4
      %s26 = int_to_ptr.vmem [resolvable:$true] %s25
      %31 = dma.hbm_to_vmem [thread:$0]  %s24, 128, %s26, [#allocation3], 64, 64, 4
    $region5: #{tpu_custom_call.1} parent=1 // pred_fallthru
      _
    // Predicated region
    $region6: #{tpu_custom_call.1} parent=1 // pred_check
      _
    $region7: #{tpu_custom_call.1} parent=1 // pred_check_branch
      %33 = sbr.rel (0) target = $region9
    $region8: #{tpu_custom_call.1} parent=1 // pred_region
      %35 = vsyncadd [#allocation6], 0
      %s36 = sshll.u32 %s1, 4
      %s37 = int_to_ptr.hbm [resolvable:$true] %s36
      %s38 = sshll.u32 [#allocation5], 4
      %s39 = int_to_ptr.vmem [resolvable:$true] %s38
      %44 = dma.hbm_to_vmem [thread:$0]  %s37, 8192, %s39, [#allocation6], 512, 512, 32
    $region9: #{tpu_custom_call.1} parent=1 // pred_fallthru
      _
    // Predicated region
    $region10: #{tpu_custom_call.1} parent=1 // pred_check
      _
    $region11: #{tpu_custom_call.1} parent=1 // pred_check_branch
      %46 = sbr.rel (0) target = $region13
    $region12: #{tpu_custom_call.1} parent=1 // pred_region
      %48 = vsyncadd [#allocation6], 0
      %s50 = sshll.u32 %s2, 4
      %s51 = int_to_ptr.hbm [resolvable:$true] %s50
      %s52 = sshll.u32 [#allocation7], 4
      %s53 = int_to_ptr.vmem [resolvable:$true] %s52
      %55 = dma.hbm_to_vmem [thread:$0]  %s51, 128, %s53, [#allocation6]
    $region13: #{tpu_custom_call.1} parent=1 // pred_fallthru
      _
    // Predicated region
    $region14: #{tpu_custom_call.1} parent=1 // pred_check
      _
    $region15: #{tpu_custom_call.1} parent=1 // pred_check_branch
      %57 = sbr.rel (0) target = $region17
    $region16: #{tpu_custom_call.1} parent=1 // pred_region
      %59 = vsyncadd [#allocation9], 0
      %s60 = sshll.u32 %s3, 4
      %s61 = int_to_ptr.hbm [resolvable:$true] %s60
      %s62 = sshll.u32 [#allocation8], 4
      %s63 = int_to_ptr.vmem [resolvable:$true] %s62
      %68 = dma.hbm_to_vmem [thread:$0]  %s61, 32768, %s63, [#allocation9], 256, 256, 16
    $region17: #{tpu_custom_call.1} parent=1 // pred_fallthru
      _
    // Predicated region
    $region18: #{tpu_custom_call.1} parent=1 // pred_check
      _
    $region19: #{tpu_custom_call.1} parent=1 // pred_check_branch
      %70 = sbr.rel (0) target = $region21
    $region20: #{tpu_custom_call.1} parent=1 // pred_region
      %72 = vsyncadd [#allocation9], 0
      %s74 = sshll.u32 %s4, 4
      %s75 = int_to_ptr.hbm [resolvable:$true] %s74
      %s76 = sshll.u32 [#allocation10], 4
      %s77 = int_to_ptr.vmem [resolvable:$true] %s76
      %79 = dma.hbm_to_vmem [thread:$0]  %s75, 64, %s77, [#allocation9]
    $region21: #{tpu_custom_call.1} parent=1 // pred_fallthru
      _
    // Predicated region
    $region22: #{tpu_custom_call.1} parent=1 // pred_check
      _
    $region23: #{tpu_custom_call.1} parent=1 // pred_check_branch
      %81 = sbr.rel (0) target = $region25
    $region24: #{tpu_custom_call.1} parent=1 // pred_region
      %83 = vsyncadd [#allocation12], 0
      %s84 = sshll.u32 %s5, 4
      %s85 = int_to_ptr.hbm [resolvable:$true] %s84
      %s86 = sshll.u32 [#allocation11], 4
      %s87 = int_to_ptr.vmem [resolvable:$true] %s86
      %92 = dma.hbm_to_vmem [thread:$0]  %s85, 4096, %s87, [#allocation12], 64, 64, 4
    $region25: #{tpu_custom_call.1} parent=1 // pred_fallthru
      _
    // Predicated region
    $region26: #{tpu_custom_call.1} parent=1 // pred_check
      _
    $region27: #{tpu_custom_call.1} parent=1 // pred_check_branch
      %94 = sbr.rel (0) target = $region29
    $region28: #{tpu_custom_call.1} parent=1 // pred_region
      _
    $region29: #{tpu_custom_call.1} parent=1 // pred_fallthru
      _
    // Predicated region
    $region30: #{tpu_custom_call.1} parent=1 // pred_check
      _
    $region31: #{tpu_custom_call.1} parent=1 // pred_check_branch
      %96 = sbr.rel (0) target = $region33
    $region32: #{tpu_custom_call.1} parent=1 // pred_region
      %98 = vsyncadd [#allocation12], 0
      %s99 = sshll.u32 %s7, 4
      %s100 = int_to_ptr.hbm [resolvable:$true] %s99
      %s101 = sshll.u32 [#allocation13], 4
      %s102 = int_to_ptr.vmem [resolvable:$true] %s101
      %107 = dma.hbm_to_vmem [thread:$0]  %s100, 1024, %s102, [#allocation12], 64, 64, 4
    $region33: #{tpu_custom_call.1} parent=1 // pred_fallthru
      _
    // Predicated region
    $region34: #{tpu_custom_call.1} parent=1 // pred_check
      _
    $region35: #{tpu_custom_call.1} parent=1 // pred_check_branch
      %109 = sbr.rel (0) target = $region37
    $region36: #{tpu_custom_call.1} parent=1 // pred_region
      _
    $region37: #{tpu_custom_call.1} parent=1 // pred_fallthru
      _
    // Predicated region
    $region38: #{tpu_custom_call.1} parent=1 // pred_check
      _
    $region39: #{tpu_custom_call.1} parent=1 // pred_check_branch
      %111 = sbr.rel (0) target = $region41
    $region40: #{tpu_custom_call.1} parent=1 // pred_region
      %113 = dma.done [#allocation3], 128
    $region41: #{tpu_custom_call.1} parent=1 // pred_fallthru
      _
    // Predicated region
    $region42: #{tpu_custom_call.1} parent=1 // pred_check
      _
    $region43: #{tpu_custom_call.1} parent=1 // pred_check_branch
      %115 = sbr.rel (0) target = $region45
    $region44: #{tpu_custom_call.1} parent=1 // pred_region
      %117 = dma.done [#allocation6], 8192
    $region45: #{tpu_custom_call.1} parent=1 // pred_fallthru
      _
    // Predicated region
    $region46: #{tpu_custom_call.1} parent=1 // pred_check
      _
    $region47: #{tpu_custom_call.1} parent=1 // pred_check_branch
      %119 = sbr.rel (0) target = $region49
    $region48: #{tpu_custom_call.1} parent=1 // pred_region
      %121 = dma.done [#allocation6], 128
    $region49: #{tpu_custom_call.1} parent=1 // pred_fallthru
      _
    // Predicated region
    $region50: #{tpu_custom_call.1} parent=1 // pred_check
      _
    $region51: #{tpu_custom_call.1} parent=1 // pred_check_branch
      %123 = sbr.rel (0) target = $region53
    $region52: #{tpu_custom_call.1} parent=1 // pred_region
      %125 = dma.done [#allocation9], 32768
    $region53: #{tpu_custom_call.1} parent=1 // pred_fallthru
      _
    // Predicated region
    $region54: #{tpu_custom_call.1} parent=1 // pred_check
      _
    $region55: #{tpu_custom_call.1} parent=1 // pred_check_branch
      %127 = sbr.rel (0) target = $region57
    $region56: #{tpu_custom_call.1} parent=1 // pred_region
      %129 = dma.done [#allocation9], 64
    $region57: #{tpu_custom_call.1} parent=1 // pred_fallthru
      _
    // Predicated region
    $region58: #{tpu_custom_call.1} parent=1 // pred_check
      _
    $region59: #{tpu_custom_call.1} parent=1 // pred_check_branch
      %131 = sbr.rel (0) target = $region61
    $region60: #{tpu_custom_call.1} parent=1 // pred_region
      %133 = dma.done [#allocation12], 4096
    $region61: #{tpu_custom_call.1} parent=1 // pred_fallthru
      _
    // Predicated region
    $region62: #{tpu_custom_call.1} parent=1 // pred_check
      _
    $region63: #{tpu_custom_call.1} parent=1 // pred_check_branch
      %135 = sbr.rel (0) target = $region65
    $region64: #{tpu_custom_call.1} parent=1 // pred_region
      %137 = dma.done [#allocation12], 1024
    $region65: #{tpu_custom_call.1} parent=1 // pred_fallthru
      _
    %v138 = vld [vmem:[#allocation2] sm:$0xf]
    %v139 = vld [vmem:[#allocation2 + $0x4] sm:$0xf]
    %v140 = vld [vmem:[#allocation5] sm:$0xff]
    %v141 = vld [vmem:[#allocation5 + $0x8] sm:$0xff]
    %v142 = vld [vmem:[#allocation5 + $0x10] sm:$0xff]
    %v143 = vld [vmem:[#allocation5 + $0x18] sm:$0xff]
    %v144 = vld [vmem:[#allocation5 + $0x20] sm:$0xff]
    %v145 = vld [vmem:[#allocation5 + $0x28] sm:$0xff]
    %v146 = vld [vmem:[#allocation5 + $0x30] sm:$0xff]
    %v147 = vld [vmem:[#allocation5 + $0x38] sm:$0xff]
    %v148 = vld [vmem:[#allocation5 + $0x40] sm:$0xff]
    %v149 = vld [vmem:[#allocation5 + $0x48] sm:$0xff]
    %v150 = vld [vmem:[#allocation5 + $0x50] sm:$0xff]
    %v151 = vld [vmem:[#allocation5 + $0x58] sm:$0xff]
    %v152 = vld [vmem:[#allocation5 + $0x60] sm:$0xff]
    %v153 = vld [vmem:[#allocation5 + $0x68] sm:$0xff]
    %v154 = vld [vmem:[#allocation5 + $0x70] sm:$0xff]
    %v155 = vld [vmem:[#allocation5 + $0x78] sm:$0xff]
    %v156 = vld [vmem:[#allocation5 + $0x80] sm:$0xff]
    %v157 = vld [vmem:[#allocation5 + $0x88] sm:$0xff]
    %v158 = vld [vmem:[#allocation5 + $0x90] sm:$0xff]
    %v159 = vld [vmem:[#allocation5 + $0x98] sm:$0xff]
    %v160 = vld [vmem:[#allocation5 + $0xa0] sm:$0xff]
    %v161 = vld [vmem:[#allocation5 + $0xa8] sm:$0xff]
    %v162 = vld [vmem:[#allocation5 + $0xb0] sm:$0xff]
    %v163 = vld [vmem:[#allocation5 + $0xb8] sm:$0xff]
    %v164 = vld [vmem:[#allocation5 + $0xc0] sm:$0xff]
    %v165 = vld [vmem:[#allocation5 + $0xc8] sm:$0xff]
    %v166 = vld [vmem:[#allocation5 + $0xd0] sm:$0xff]
    %v167 = vld [vmem:[#allocation5 + $0xd8] sm:$0xff]
    %v168 = vld [vmem:[#allocation5 + $0xe0] sm:$0xff]
    %v169 = vld [vmem:[#allocation5 + $0xe8] sm:$0xff]
    %v170 = vld [vmem:[#allocation5 + $0xf0] sm:$0xff]
    %v171 = vld [vmem:[#allocation5 + $0xf8] sm:$0xff]
    %v172 = vld [vmem:[#allocation5 + $0x100] sm:$0xff]
    %v173 = vld [vmem:[#allocation5 + $0x108] sm:$0xff]
    %v174 = vld [vmem:[#allocation5 + $0x110] sm:$0xff]
    %v175 = vld [vmem:[#allocation5 + $0x118] sm:$0xff]
    %v176 = vld [vmem:[#allocation5 + $0x120] sm:$0xff]
    %v177 = vld [vmem:[#allocation5 + $0x128] sm:$0xff]
    %v178 = vld [vmem:[#allocation5 + $0x130] sm:$0xff]
    %v179 = vld [vmem:[#allocation5 + $0x138] sm:$0xff]
    %v180 = vld [vmem:[#allocation5 + $0x140] sm:$0xff]
    %v181 = vld [vmem:[#allocation5 + $0x148] sm:$0xff]
    %v182 = vld [vmem:[#allocation5 + $0x150] sm:$0xff]
    %v183 = vld [vmem:[#allocation5 + $0x158] sm:$0xff]
    %v184 = vld [vmem:[#allocation5 + $0x160] sm:$0xff]
    %v185 = vld [vmem:[#allocation5 + $0x168] sm:$0xff]
    %v186 = vld [vmem:[#allocation5 + $0x170] sm:$0xff]
    %v187 = vld [vmem:[#allocation5 + $0x178] sm:$0xff]
    %v188 = vld [vmem:[#allocation5 + $0x180] sm:$0xff]
    %v189 = vld [vmem:[#allocation5 + $0x188] sm:$0xff]
    %v190 = vld [vmem:[#allocation5 + $0x190] sm:$0xff]
    %v191 = vld [vmem:[#allocation5 + $0x198] sm:$0xff]
    %v192 = vld [vmem:[#allocation5 + $0x1a0] sm:$0xff]
    %v193 = vld [vmem:[#allocation5 + $0x1a8] sm:$0xff]
    %v194 = vld [vmem:[#allocation5 + $0x1b0] sm:$0xff]
    %v195 = vld [vmem:[#allocation5 + $0x1b8] sm:$0xff]
    %v196 = vld [vmem:[#allocation5 + $0x1c0] sm:$0xff]
    %v197 = vld [vmem:[#allocation5 + $0x1c8] sm:$0xff]
    %v198 = vld [vmem:[#allocation5 + $0x1d0] sm:$0xff]
    %v199 = vld [vmem:[#allocation5 + $0x1d8] sm:$0xff]
    %v200 = vld [vmem:[#allocation5 + $0x1e0] sm:$0xff]
    %v201 = vld [vmem:[#allocation5 + $0x1e8] sm:$0xff]
    %v202 = vld [vmem:[#allocation5 + $0x1f0] sm:$0xff]
    %v203 = vld [vmem:[#allocation5 + $0x1f8] sm:$0xff]
    %v204 = vld [vmem:[#allocation7] sm:$0xff]
    %v206 = vperm.slane %v204, 0
    %v207 = vperm.slane %v204, 1
    %v208 = vperm.slane %v204, 2
    %v209 = vperm.slane %v204, 3
    %v210 = vperm.slane %v204, 4
    %v211 = vperm.slane %v204, 5
    %v212 = vperm.slane %v204, 6
    %v213 = vperm.slane %v204, 7
    %v224 = vunpack.c.l.b16 %v138
    %v225 = vunpack.c.l.b16 %v139
    %v226 = vpack.c.b16 %v225, %v224
    %v292 = vunpack.c.l.b16 %v140
    %v293 = vunpack.c.h.b16 %v140
    %v294 = vunpack.c.l.b16 %v141
    %v295 = vunpack.c.h.b16 %v141
    %v296 = vunpack.c.l.b16 %v142
    %v297 = vunpack.c.h.b16 %v142
    %v298 = vunpack.c.l.b16 %v143
    %v299 = vunpack.c.h.b16 %v143
    %v300 = vunpack.c.l.b16 %v144
    %v301 = vunpack.c.h.b16 %v144
    %v302 = vunpack.c.l.b16 %v145
    %v303 = vunpack.c.h.b16 %v145
    %v304 = vunpack.c.l.b16 %v146
    %v305 = vunpack.c.h.b16 %v146
    %v306 = vunpack.c.l.b16 %v147
    %v307 = vunpack.c.h.b16 %v147
    %v308 = vunpack.c.l.b16 %v148
    %v309 = vunpack.c.h.b16 %v148
    %v310 = vunpack.c.l.b16 %v149
    %v311 = vunpack.c.h.b16 %v149
    %v312 = vunpack.c.l.b16 %v150
    %v313 = vunpack.c.h.b16 %v150
    %v314 = vunpack.c.l.b16 %v151
    %v315 = vunpack.c.h.b16 %v151
    %v316 = vunpack.c.l.b16 %v152
    %v317 = vunpack.c.h.b16 %v152
    %v318 = vunpack.c.l.b16 %v153
    %v319 = vunpack.c.h.b16 %v153
    %v320 = vunpack.c.l.b16 %v154
    %v321 = vunpack.c.h.b16 %v154
    %v322 = vunpack.c.l.b16 %v155
    %v323 = vunpack.c.h.b16 %v155
    %v324 = vunpack.c.l.b16 %v156
    %v325 = vunpack.c.h.b16 %v156
    %v326 = vunpack.c.l.b16 %v157
    %v327 = vunpack.c.h.b16 %v157
    %v328 = vunpack.c.l.b16 %v158
    %v329 = vunpack.c.h.b16 %v158
    %v330 = vunpack.c.l.b16 %v159
    %v331 = vunpack.c.h.b16 %v159
    %v332 = vunpack.c.l.b16 %v160
    %v333 = vunpack.c.h.b16 %v160
    %v334 = vunpack.c.l.b16 %v161
    %v335 = vunpack.c.h.b16 %v161
    %v336 = vunpack.c.l.b16 %v162
    %v337 = vunpack.c.h.b16 %v162
    %v338 = vunpack.c.l.b16 %v163
    %v339 = vunpack.c.h.b16 %v163
    %v340 = vunpack.c.l.b16 %v164
    %v341 = vunpack.c.h.b16 %v164
    %v342 = vunpack.c.l.b16 %v165
    %v343 = vunpack.c.h.b16 %v165
    %v344 = vunpack.c.l.b16 %v166
    %v345 = vunpack.c.h.b16 %v166
    %v346 = vunpack.c.l.b16 %v167
    %v347 = vunpack.c.h.b16 %v167
    %v348 = vunpack.c.l.b16 %v168
    %v349 = vunpack.c.h.b16 %v168
    %v350 = vunpack.c.l.b16 %v169
    %v351 = vunpack.c.h.b16 %v169
    %v352 = vunpack.c.l.b16 %v170
    %v353 = vunpack.c.h.b16 %v170
    %v354 = vunpack.c.l.b16 %v171
    %v355 = vunpack.c.h.b16 %v171
    %v356 = vunpack.c.l.b16 %v172
    %v357 = vunpack.c.h.b16 %v172
    %v358 = vunpack.c.l.b16 %v173
    %v359 = vunpack.c.h.b16 %v173
    %v360 = vunpack.c.l.b16 %v174
    %v361 = vunpack.c.h.b16 %v174
    %v362 = vunpack.c.l.b16 %v175
    %v363 = vunpack.c.h.b16 %v175
    %v364 = vunpack.c.l.b16 %v176
    %v365 = vunpack.c.h.b16 %v176
    %v366 = vunpack.c.l.b16 %v177
    %v367 = vunpack.c.h.b16 %v177
    %v368 = vunpack.c.l.b16 %v178
    %v369 = vunpack.c.h.b16 %v178
    %v370 = vunpack.c.l.b16 %v179
    %v371 = vunpack.c.h.b16 %v179
    %v372 = vunpack.c.l.b16 %v180
    %v373 = vunpack.c.h.b16 %v180
    %v374 = vunpack.c.l.b16 %v181
    %v375 = vunpack.c.h.b16 %v181
    %v376 = vunpack.c.l.b16 %v182
    %v377 = vunpack.c.h.b16 %v182
    %v378 = vunpack.c.l.b16 %v183
    %v379 = vunpack.c.h.b16 %v183
    %v380 = vunpack.c.l.b16 %v184
    %v381 = vunpack.c.h.b16 %v184
    %v382 = vunpack.c.l.b16 %v185
    %v383 = vunpack.c.h.b16 %v185
    %v384 = vunpack.c.l.b16 %v186
    %v385 = vunpack.c.h.b16 %v186
    %v386 = vunpack.c.l.b16 %v187
    %v387 = vunpack.c.h.b16 %v187
    %v388 = vunpack.c.l.b16 %v188
    %v389 = vunpack.c.h.b16 %v188
    %v390 = vunpack.c.l.b16 %v189
    %v391 = vunpack.c.h.b16 %v189
    %v392 = vunpack.c.l.b16 %v190
    %v393 = vunpack.c.h.b16 %v190
    %v394 = vunpack.c.l.b16 %v191
    %v395 = vunpack.c.h.b16 %v191
    %v396 = vunpack.c.l.b16 %v192
    %v397 = vunpack.c.h.b16 %v192
    %v398 = vunpack.c.l.b16 %v193
    %v399 = vunpack.c.h.b16 %v193
    %v400 = vunpack.c.l.b16 %v194
    %v401 = vunpack.c.h.b16 %v194
    %v402 = vunpack.c.l.b16 %v195
    %v403 = vunpack.c.h.b16 %v195
    %v404 = vunpack.c.l.b16 %v196
    %v405 = vunpack.c.h.b16 %v196
    %v406 = vunpack.c.l.b16 %v197
    %v407 = vunpack.c.h.b16 %v197
    %v408 = vunpack.c.l.b16 %v198
    %v409 = vunpack.c.h.b16 %v198
    %v410 = vunpack.c.l.b16 %v199
    %v411 = vunpack.c.h.b16 %v199
    %v412 = vunpack.c.l.b16 %v200
    %v413 = vunpack.c.h.b16 %v200
    %v414 = vunpack.c.l.b16 %v201
    %v415 = vunpack.c.h.b16 %v201
    %v416 = vunpack.c.l.b16 %v202
    %v417 = vunpack.c.h.b16 %v202
    %v418 = vunpack.c.l.b16 %v203
    %v419 = vunpack.c.h.b16 %v203
    %v420 = vpack.c.b16 %v300, %v292
    %v421 = vpack.c.b16 %v301, %v293
    %v422 = vpack.c.b16 %v302, %v294
    %v423 = vpack.c.b16 %v303, %v295
    %v424 = vpack.c.b16 %v304, %v296
    %v425 = vpack.c.b16 %v305, %v297
    %v426 = vpack.c.b16 %v306, %v298
    %v427 = vpack.c.b16 %v307, %v299
    %v428 = vpack.c.b16 %v316, %v308
    %v429 = vpack.c.b16 %v317, %v309
    %v430 = vpack.c.b16 %v318, %v310
    %v431 = vpack.c.b16 %v319, %v311
    %v432 = vpack.c.b16 %v320, %v312
    %v433 = vpack.c.b16 %v321, %v313
    %v434 = vpack.c.b16 %v322, %v314
    %v435 = vpack.c.b16 %v323, %v315
    %v436 = vpack.c.b16 %v332, %v324
    %v437 = vpack.c.b16 %v333, %v325
    %v438 = vpack.c.b16 %v334, %v326
    %v439 = vpack.c.b16 %v335, %v327
    %v440 = vpack.c.b16 %v336, %v328
    %v441 = vpack.c.b16 %v337, %v329
    %v442 = vpack.c.b16 %v338, %v330
    %v443 = vpack.c.b16 %v339, %v331
    %v444 = vpack.c.b16 %v348, %v340
    %v445 = vpack.c.b16 %v349, %v341
    %v446 = vpack.c.b16 %v350, %v342
    %v447 = vpack.c.b16 %v351, %v343
    %v448 = vpack.c.b16 %v352, %v344
    %v449 = vpack.c.b16 %v353, %v345
    %v450 = vpack.c.b16 %v354, %v346
    %v451 = vpack.c.b16 %v355, %v347
    %v452 = vpack.c.b16 %v364, %v356
    %v453 = vpack.c.b16 %v365, %v357
    %v454 = vpack.c.b16 %v366, %v358
    %v455 = vpack.c.b16 %v367, %v359
    %v456 = vpack.c.b16 %v368, %v360
    %v457 = vpack.c.b16 %v369, %v361
    %v458 = vpack.c.b16 %v370, %v362
    %v459 = vpack.c.b16 %v371, %v363
    %v460 = vpack.c.b16 %v380, %v372
    %v461 = vpack.c.b16 %v381, %v373
    %v462 = vpack.c.b16 %v382, %v374
    %v463 = vpack.c.b16 %v383, %v375
    %v464 = vpack.c.b16 %v384, %v376
    %v465 = vpack.c.b16 %v385, %v377
    %v466 = vpack.c.b16 %v386, %v378
    %v467 = vpack.c.b16 %v387, %v379
    %v468 = vpack.c.b16 %v396, %v388
    %v469 = vpack.c.b16 %v397, %v389
    %v470 = vpack.c.b16 %v398, %v390
    %v471 = vpack.c.b16 %v399, %v391
    %v472 = vpack.c.b16 %v400, %v392
    %v473 = vpack.c.b16 %v401, %v393
    %v474 = vpack.c.b16 %v402, %v394
    %v475 = vpack.c.b16 %v403, %v395
    %v476 = vpack.c.b16 %v412, %v404
    %v477 = vpack.c.b16 %v413, %v405
    %v478 = vpack.c.b16 %v414, %v406
    %v479 = vpack.c.b16 %v415, %v407
    %v480 = vpack.c.b16 %v416, %v408
    %v481 = vpack.c.b16 %v417, %v409
    %v482 = vpack.c.b16 %v418, %v410
    %v483 = vpack.c.b16 %v419, %v411
    %548 = vmatpush.bf16.msra.mxu0 %v476
    %549 = vmatpush.bf16.msra.mxu0 %v468
    %550 = vmatpush.bf16.msra.mxu0 %v460
    %551 = vmatpush.bf16.msra.mxu0 %v452
    %552 = vmatpush.bf16.msra.mxu0 %v444
    %553 = vmatpush.bf16.msra.mxu0 %v436
    %554 = vmatpush.bf16.msra.mxu0 %v428
    %555 = vmatpush.bf16.msra.mxu0 %v420
    %556 = vmatmul.bf16.gmra.mxu0 %v226
    %v557 = vpop.f32.mrf.mxu0
    %v558 = vadd.f32 %v206, %v557
    %v559 = vpop.f32.mrf.mxu0
    %v560 = vadd.f32 %v206, %v559
    %561 = vdwg.mxu0
    %562 = vmatpush.bf16.msra.mxu0 %v477
    %563 = vmatpush.bf16.msra.mxu0 %v469
    %564 = vmatpush.bf16.msra.mxu0 %v461
    %565 = vmatpush.bf16.msra.mxu0 %v453
    %566 = vmatpush.bf16.msra.mxu0 %v445
    %567 = vmatpush.bf16.msra.mxu0 %v437
    %568 = vmatpush.bf16.msra.mxu0 %v429
    %569 = vmatpush.bf16.msra.mxu0 %v421
    %570 = vmatmul.bf16.gmra.mxu0 %v226
    %v571 = vpop.f32.mrf.mxu0
    %v572 = vadd.f32 %v207, %v571
    %v573 = vpop.f32.mrf.mxu0
    %v574 = vadd.f32 %v207, %v573
    %575 = vdwg.mxu0
    %576 = vmatpush.bf16.msra.mxu0 %v478
    %577 = vmatpush.bf16.msra.mxu0 %v470
    %578 = vmatpush.bf16.msra.mxu0 %v462
    %579 = vmatpush.bf16.msra.mxu0 %v454
    %580 = vmatpush.bf16.msra.mxu0 %v446
    %581 = vmatpush.bf16.msra.mxu0 %v438
    %582 = vmatpush.bf16.msra.mxu0 %v430
    %583 = vmatpush.bf16.msra.mxu0 %v422
    %584 = vmatmul.bf16.gmra.mxu0 %v226
    %v585 = vpop.f32.mrf.mxu0
    %v586 = vadd.f32 %v208, %v585
    %v587 = vpop.f32.mrf.mxu0
    %v588 = vadd.f32 %v208, %v587
    %589 = vdwg.mxu0
    %590 = vmatpush.bf16.msra.mxu0 %v479
    %591 = vmatpush.bf16.msra.mxu0 %v471
    %592 = vmatpush.bf16.msra.mxu0 %v463
    %593 = vmatpush.bf16.msra.mxu0 %v455
    %594 = vmatpush.bf16.msra.mxu0 %v447
    %595 = vmatpush.bf16.msra.mxu0 %v439
    %596 = vmatpush.bf16.msra.mxu0 %v431
    %597 = vmatpush.bf16.msra.mxu0 %v423
    %598 = vmatmul.bf16.gmra.mxu0 %v226
    %v599 = vpop.f32.mrf.mxu0
    %v600 = vadd.f32 %v209, %v599
    %v601 = vpop.f32.mrf.mxu0
    %v602 = vadd.f32 %v209, %v601
    %603 = vdwg.mxu0
    %604 = vmatpush.bf16.msra.mxu0 %v480
    %605 = vmatpush.bf16.msra.mxu0 %v472
    %606 = vmatpush.bf16.msra.mxu0 %v464
    %607 = vmatpush.bf16.msra.mxu0 %v456
    %608 = vmatpush.bf16.msra.mxu0 %v448
    %609 = vmatpush.bf16.msra.mxu0 %v440
    %610 = vmatpush.bf16.msra.mxu0 %v432
    %611 = vmatpush.bf16.msra.mxu0 %v424
    %612 = vmatmul.bf16.gmra.mxu0 %v226
    %v613 = vpop.f32.mrf.mxu0
    %v614 = vadd.f32 %v210, %v613
    %v615 = vpop.f32.mrf.mxu0
    %v616 = vadd.f32 %v210, %v615
    %617 = vdwg.mxu0
    %618 = vmatpush.bf16.msra.mxu0 %v481
    %619 = vmatpush.bf16.msra.mxu0 %v473
    %620 = vmatpush.bf16.msra.mxu0 %v465
    %621 = vmatpush.bf16.msra.mxu0 %v457
    %622 = vmatpush.bf16.msra.mxu0 %v449
    %623 = vmatpush.bf16.msra.mxu0 %v441
    %624 = vmatpush.bf16.msra.mxu0 %v433
    %625 = vmatpush.bf16.msra.mxu0 %v425
    %626 = vmatmul.bf16.gmra.mxu0 %v226
    %v627 = vpop.f32.mrf.mxu0
    %v628 = vadd.f32 %v211, %v627
    %v629 = vpop.f32.mrf.mxu0
    %v630 = vadd.f32 %v211, %v629
    %631 = vdwg.mxu0
    %632 = vmatpush.bf16.msra.mxu0 %v482
    %633 = vmatpush.bf16.msra.mxu0 %v474
    %634 = vmatpush.bf16.msra.mxu0 %v466
    %635 = vmatpush.bf16.msra.mxu0 %v458
    %636 = vmatpush.bf16.msra.mxu0 %v450
    %637 = vmatpush.bf16.msra.mxu0 %v442
    %638 = vmatpush.bf16.msra.mxu0 %v434
    %639 = vmatpush.bf16.msra.mxu0 %v426
    %640 = vmatmul.bf16.gmra.mxu0 %v226
    %v641 = vpop.f32.mrf.mxu0
    %v642 = vadd.f32 %v212, %v641
    %v643 = vpop.f32.mrf.mxu0
    %v644 = vadd.f32 %v212, %v643
    %645 = vdwg.mxu0
    %646 = vmatpush.bf16.msra.mxu0 %v483
    %647 = vmatpush.bf16.msra.mxu0 %v475
    %648 = vmatpush.bf16.msra.mxu0 %v467
    %649 = vmatpush.bf16.msra.mxu0 %v459
    %650 = vmatpush.bf16.msra.mxu0 %v451
    %651 = vmatpush.bf16.msra.mxu0 %v443
    %652 = vmatpush.bf16.msra.mxu0 %v435
    %653 = vmatpush.bf16.msra.mxu0 %v427
    %654 = vmatmul.bf16.gmra.mxu0 %v226
    %v655 = vpop.f32.mrf.mxu0
    %v656 = vadd.f32 %v213, %v655
    %v657 = vpop.f32.mrf.mxu0
    %v658 = vadd.f32 %v213, %v657
    %659 = vdwg.mxu0
    %v660 = vpack.c.bf16 %v572, %v558
    %v661 = vpack.c.bf16 %v600, %v586
    %v662 = vpack.c.bf16 %v628, %v614
    %v663 = vpack.c.bf16 %v656, %v642
    %v664 = vpack.c.bf16 %v574, %v560
    %v665 = vpack.c.bf16 %v602, %v588
    %v666 = vpack.c.bf16 %v630, %v616
    %v667 = vpack.c.bf16 %v658, %v644
    %v668 = vunpack.c.l.bf16 %v660
    %v669 = vunpack.c.h.bf16 %v660
    %v670 = vunpack.c.l.bf16 %v661
    %v671 = vunpack.c.h.bf16 %v661
    %v672 = vunpack.c.l.bf16 %v662
    %v673 = vunpack.c.h.bf16 %v662
    %v674 = vunpack.c.l.bf16 %v663
    %v675 = vunpack.c.h.bf16 %v663
    %v676 = vunpack.c.l.bf16 %v664
    %v677 = vunpack.c.h.bf16 %v664
    %v678 = vunpack.c.l.bf16 %v665
    %v679 = vunpack.c.h.bf16 %v665
    %v680 = vunpack.c.l.bf16 %v666
    %v681 = vunpack.c.h.bf16 %v666
    %v682 = vunpack.c.l.bf16 %v667
    %v683 = vunpack.c.h.bf16 %v667
    %v684 = vmul.f32 %v668, 0.100097656
    %v685 = vmul.f32 %v669, 0.100097656
    %v686 = vmul.f32 %v670, 0.100097656
    %v687 = vmul.f32 %v671, 0.100097656
    %v688 = vmul.f32 %v672, 0.100097656
    %v689 = vmul.f32 %v673, 0.100097656
    %v690 = vmul.f32 %v674, 0.100097656
    %v691 = vmul.f32 %v675, 0.100097656
    %v692 = vmul.f32 %v676, 0.100097656
    %v693 = vmul.f32 %v677, 0.100097656
    %v694 = vmul.f32 %v678, 0.100097656
    %v695 = vmul.f32 %v679, 0.100097656
    %v696 = vmul.f32 %v680, 0.100097656
    %v697 = vmul.f32 %v681, 0.100097656
    %v698 = vmul.f32 %v682, 0.100097656
    %v699 = vmul.f32 %v683, 0.100097656
    %v700 = vpack.c.bf16 %v685, %v684
    %v701 = vpack.c.bf16 %v687, %v686
    %v702 = vpack.c.bf16 %v689, %v688
    %v703 = vpack.c.bf16 %v691, %v690
    %v704 = vpack.c.bf16 %v693, %v692
    %v705 = vpack.c.bf16 %v695, %v694
    %v706 = vpack.c.bf16 %v697, %v696
    %v707 = vpack.c.bf16 %v699, %v698
    %v708 = vunpack.c.l.bf16 %v700
    %v709 = vunpack.c.h.bf16 %v700
    %v710 = vunpack.c.l.bf16 %v701
    %v711 = vunpack.c.h.bf16 %v701
    %v712 = vunpack.c.l.bf16 %v702
    %v713 = vunpack.c.h.bf16 %v702
    %v714 = vunpack.c.l.bf16 %v703
    %v715 = vunpack.c.h.bf16 %v703
    %v716 = vunpack.c.l.bf16 %v704
    %v717 = vunpack.c.h.bf16 %v704
    %v718 = vunpack.c.l.bf16 %v705
    %v719 = vunpack.c.h.bf16 %v705
    %v720 = vunpack.c.l.bf16 %v706
    %v721 = vunpack.c.h.bf16 %v706
    %v722 = vunpack.c.l.bf16 %v707
    %v723 = vunpack.c.h.bf16 %v707
    %v724 = vmax.f32 %v668, %v708
    %v725 = vmax.f32 %v669, %v709
    %v726 = vmax.f32 %v670, %v710
    %v727 = vmax.f32 %v671, %v711
    %v728 = vmax.f32 %v672, %v712
    %v729 = vmax.f32 %v673, %v713
    %v730 = vmax.f32 %v674, %v714
    %v731 = vmax.f32 %v675, %v715
    %v732 = vmax.f32 %v676, %v716
    %v733 = vmax.f32 %v677, %v717
    %v734 = vmax.f32 %v678, %v718
    %v735 = vmax.f32 %v679, %v719
    %v736 = vmax.f32 %v680, %v720
    %v737 = vmax.f32 %v681, %v721
    %v738 = vmax.f32 %v682, %v722
    %v739 = vmax.f32 %v683, %v723
    %v740 = vpack.c.bf16 %v732, %v724
    %v741 = vpack.c.bf16 %v733, %v725
    %v742 = vpack.c.bf16 %v734, %v726
    %v743 = vpack.c.bf16 %v735, %v727
    %v744 = vpack.c.bf16 %v736, %v728
    %v745 = vpack.c.bf16 %v737, %v729
    %v746 = vpack.c.bf16 %v738, %v730
    %v747 = vpack.c.bf16 %v739, %v731
    %v748 = vld [vmem:[#allocation8] sm:$0xff]
    %v749 = vld [vmem:[#allocation8 + $0x8] sm:$0xff]
    %v750 = vld [vmem:[#allocation8 + $0x10] sm:$0xff]
    %v751 = vld [vmem:[#allocation8 + $0x18] sm:$0xff]
    %v752 = vld [vmem:[#allocation8 + $0x20] sm:$0xff]
    %v753 = vld [vmem:[#allocation8 + $0x28] sm:$0xff]
    %v754 = vld [vmem:[#allocation8 + $0x30] sm:$0xff]
    %v755 = vld [vmem:[#allocation8 + $0x38] sm:$0xff]
    %v756 = vld [vmem:[#allocation8 + $0x40] sm:$0xff]
    %v757 = vld [vmem:[#allocation8 + $0x48] sm:$0xff]
    %v758 = vld [vmem:[#allocation8 + $0x50] sm:$0xff]
    %v759 = vld [vmem:[#allocation8 + $0x58] sm:$0xff]
    %v760 = vld [vmem:[#allocation8 + $0x60] sm:$0xff]
    %v761 = vld [vmem:[#allocation8 + $0x68] sm:$0xff]
    %v762 = vld [vmem:[#allocation8 + $0x70] sm:$0xff]
    %v763 = vld [vmem:[#allocation8 + $0x78] sm:$0xff]
    %v764 = vld [vmem:[#allocation8 + $0x80] sm:$0xff]
    %v765 = vld [vmem:[#allocation8 + $0x88] sm:$0xff]
    %v766 = vld [vmem:[#allocation8 + $0x90] sm:$0xff]
    %v767 = vld [vmem:[#allocation8 + $0x98] sm:$0xff]
    %v768 = vld [vmem:[#allocation8 + $0xa0] sm:$0xff]
    %v769 = vld [vmem:[#allocation8 + $0xa8] sm:$0xff]
    %v770 = vld [vmem:[#allocation8 + $0xb0] sm:$0xff]
    %v771 = vld [vmem:[#allocation8 + $0xb8] sm:$0xff]
    %v772 = vld [vmem:[#allocation8 + $0xc0] sm:$0xff]
    %v773 = vld [vmem:[#allocation8 + $0xc8] sm:$0xff]
    %v774 = vld [vmem:[#allocation8 + $0xd0] sm:$0xff]
    %v775 = vld [vmem:[#allocation8 + $0xd8] sm:$0xff]
    %v776 = vld [vmem:[#allocation8 + $0xe0] sm:$0xff]
    %v777 = vld [vmem:[#allocation8 + $0xe8] sm:$0xff]
    %v778 = vld [vmem:[#allocation8 + $0xf0] sm:$0xff]
    %v779 = vld [vmem:[#allocation8 + $0xf8] sm:$0xff]
    %v780 = vld [vmem:[#allocation8 + $0x100] sm:$0xff]
    %v781 = vld [vmem:[#allocation8 + $0x108] sm:$0xff]
    %v782 = vld [vmem:[#allocation8 + $0x110] sm:$0xff]
    %v783 = vld [vmem:[#allocation8 + $0x118] sm:$0xff]
    %v784 = vld [vmem:[#allocation8 + $0x120] sm:$0xff]
    %v785 = vld [vmem:[#allocation8 + $0x128] sm:$0xff]
    %v786 = vld [vmem:[#allocation8 + $0x130] sm:$0xff]
    %v787 = vld [vmem:[#allocation8 + $0x138] sm:$0xff]
    %v788 = vld [vmem:[#allocation8 + $0x140] sm:$0xff]
    %v789 = vld [vmem:[#allocation8 + $0x148] sm:$0xff]
    %v790 = vld [vmem:[#allocation8 + $0x150] sm:$0xff]
    %v791 = vld [vmem:[#allocation8 + $0x158] sm:$0xff]
    %v792 = vld [vmem:[#allocation8 + $0x160] sm:$0xff]
    %v793 = vld [vmem:[#allocation8 + $0x168] sm:$0xff]
    %v794 = vld [vmem:[#allocation8 + $0x170] sm:$0xff]
    %v795 = vld [vmem:[#allocation8 + $0x178] sm:$0xff]
    %v796 = vld [vmem:[#allocation8 + $0x180] sm:$0xff]
    %v797 = vld [vmem:[#allocation8 + $0x188] sm:$0xff]
    %v798 = vld [vmem:[#allocation8 + $0x190] sm:$0xff]
    %v799 = vld [vmem:[#allocation8 + $0x198] sm:$0xff]
    %v800 = vld [vmem:[#allocation8 + $0x1a0] sm:$0xff]
    %v801 = vld [vmem:[#allocation8 + $0x1a8] sm:$0xff]
    %v802 = vld [vmem:[#allocation8 + $0x1b0] sm:$0xff]
    %v803 = vld [vmem:[#allocation8 + $0x1b8] sm:$0xff]
    %v804 = vld [vmem:[#allocation8 + $0x1c0] sm:$0xff]
    %v805 = vld [vmem:[#allocation8 + $0x1c8] sm:$0xff]
    %v806 = vld [vmem:[#allocation8 + $0x1d0] sm:$0xff]
    %v807 = vld [vmem:[#allocation8 + $0x1d8] sm:$0xff]
    %v808 = vld [vmem:[#allocation8 + $0x1e0] sm:$0xff]
    %v809 = vld [vmem:[#allocation8 + $0x1e8] sm:$0xff]
    %v810 = vld [vmem:[#allocation8 + $0x1f0] sm:$0xff]
    %v811 = vld [vmem:[#allocation8 + $0x1f8] sm:$0xff]
    %v812 = vld [vmem:[#allocation8 + $0x200] sm:$0xff]
    %v813 = vld [vmem:[#allocation8 + $0x208] sm:$0xff]
    %v814 = vld [vmem:[#allocation8 + $0x210] sm:$0xff]
    %v815 = vld [vmem:[#allocation8 + $0x218] sm:$0xff]
    %v816 = vld [vmem:[#allocation8 + $0x220] sm:$0xff]
    %v817 = vld [vmem:[#allocation8 + $0x228] sm:$0xff]
    %v818 = vld [vmem:[#allocation8 + $0x230] sm:$0xff]
    %v819 = vld [vmem:[#allocation8 + $0x238] sm:$0xff]
    %v820 = vld [vmem:[#allocation8 + $0x240] sm:$0xff]
    %v821 = vld [vmem:[#allocation8 + $0x248] sm:$0xff]
    %v822 = vld [vmem:[#allocation8 + $0x250] sm:$0xff]
    %v823 = vld [vmem:[#allocation8 + $0x258] sm:$0xff]
    %v824 = vld [vmem:[#allocation8 + $0x260] sm:$0xff]
    %v825 = vld [vmem:[#allocation8 + $0x268] sm:$0xff]
    %v826 = vld [vmem:[#allocation8 + $0x270] sm:$0xff]
    %v827 = vld [vmem:[#allocation8 + $0x278] sm:$0xff]
    %v828 = vld [vmem:[#allocation8 + $0x280] sm:$0xff]
    %v829 = vld [vmem:[#allocation8 + $0x288] sm:$0xff]
    %v830 = vld [vmem:[#allocation8 + $0x290] sm:$0xff]
    %v831 = vld [vmem:[#allocation8 + $0x298] sm:$0xff]
    %v832 = vld [vmem:[#allocation8 + $0x2a0] sm:$0xff]
    %v833 = vld [vmem:[#allocation8 + $0x2a8] sm:$0xff]
    %v834 = vld [vmem:[#allocation8 + $0x2b0] sm:$0xff]
    %v835 = vld [vmem:[#allocation8 + $0x2b8] sm:$0xff]
    %v836 = vld [vmem:[#allocation8 + $0x2c0] sm:$0xff]
    %v837 = vld [vmem:[#allocation8 + $0x2c8] sm:$0xff]
    %v838 = vld [vmem:[#allocation8 + $0x2d0] sm:$0xff]
    %v839 = vld [vmem:[#allocation8 + $0x2d8] sm:$0xff]
    %v840 = vld [vmem:[#allocation8 + $0x2e0] sm:$0xff]
    %v841 = vld [vmem:[#allocation8 + $0x2e8] sm:$0xff]
    %v842 = vld [vmem:[#allocation8 + $0x2f0] sm:$0xff]
    %v843 = vld [vmem:[#allocation8 + $0x2f8] sm:$0xff]
    %v844 = vld [vmem:[#allocation8 + $0x300] sm:$0xff]
    %v845 = vld [vmem:[#allocation8 + $0x308] sm:$0xff]
    %v846 = vld [vmem:[#allocation8 + $0x310] sm:$0xff]
    %v847 = vld [vmem:[#allocation8 + $0x318] sm:$0xff]
    %v848 = vld [vmem:[#allocation8 + $0x320] sm:$0xff]
    %v849 = vld [vmem:[#allocation8 + $0x328] sm:$0xff]
    %v850 = vld [vmem:[#allocation8 + $0x330] sm:$0xff]
    %v851 = vld [vmem:[#allocation8 + $0x338] sm:$0xff]
    %v852 = vld [vmem:[#allocation8 + $0x340] sm:$0xff]
    %v853 = vld [vmem:[#allocation8 + $0x348] sm:$0xff]
    %v854 = vld [vmem:[#allocation8 + $0x350] sm:$0xff]
    %v855 = vld [vmem:[#allocation8 + $0x358] sm:$0xff]
    %v856 = vld [vmem:[#allocation8 + $0x360] sm:$0xff]
    %v857 = vld [vmem:[#allocation8 + $0x368] sm:$0xff]
    %v858 = vld [vmem:[#allocation8 + $0x370] sm:$0xff]
    %v859 = vld [vmem:[#allocation8 + $0x378] sm:$0xff]
    %v860 = vld [vmem:[#allocation8 + $0x380] sm:$0xff]
    %v861 = vld [vmem:[#allocation8 + $0x388] sm:$0xff]
    %v862 = vld [vmem:[#allocation8 + $0x390] sm:$0xff]
    %v863 = vld [vmem:[#allocation8 + $0x398] sm:$0xff]
    %v864 = vld [vmem:[#allocation8 + $0x3a0] sm:$0xff]
    %v865 = vld [vmem:[#allocation8 + $0x3a8] sm:$0xff]
    %v866 = vld [vmem:[#allocation8 + $0x3b0] sm:$0xff]
    %v867 = vld [vmem:[#allocation8 + $0x3b8] sm:$0xff]
    %v868 = vld [vmem:[#allocation8 + $0x3c0] sm:$0xff]
    %v869 = vld [vmem:[#allocation8 + $0x3c8] sm:$0xff]
    %v870 = vld [vmem:[#allocation8 + $0x3d0] sm:$0xff]
    %v871 = vld [vmem:[#allocation8 + $0x3d8] sm:$0xff]
    %v872 = vld [vmem:[#allocation8 + $0x3e0] sm:$0xff]
    %v873 = vld [vmem:[#allocation8 + $0x3e8] sm:$0xff]
    %v874 = vld [vmem:[#allocation8 + $0x3f0] sm:$0xff]
    %v875 = vld [vmem:[#allocation8 + $0x3f8] sm:$0xff]
    %v876 = vld [vmem:[#allocation8 + $0x400] sm:$0xff]
    %v877 = vld [vmem:[#allocation8 + $0x408] sm:$0xff]
    %v878 = vld [vmem:[#allocation8 + $0x410] sm:$0xff]
    %v879 = vld [vmem:[#allocation8 + $0x418] sm:$0xff]
    %v880 = vld [vmem:[#allocation8 + $0x420] sm:$0xff]
    %v881 = vld [vmem:[#allocation8 + $0x428] sm:$0xff]
    %v882 = vld [vmem:[#allocation8 + $0x430] sm:$0xff]
    %v883 = vld [vmem:[#allocation8 + $0x438] sm:$0xff]
    %v884 = vld [vmem:[#allocation8 + $0x440] sm:$0xff]
    %v885 = vld [vmem:[#allocation8 + $0x448] sm:$0xff]
    %v886 = vld [vmem:[#allocation8 + $0x450] sm:$0xff]
    %v887 = vld [vmem:[#allocation8 + $0x458] sm:$0xff]
    %v888 = vld [vmem:[#allocation8 + $0x460] sm:$0xff]
    %v889 = vld [vmem:[#allocation8 + $0x468] sm:$0xff]
    %v890 = vld [vmem:[#allocation8 + $0x470] sm:$0xff]
    %v891 = vld [vmem:[#allocation8 + $0x478] sm:$0xff]
    %v892 = vld [vmem:[#allocation8 + $0x480] sm:$0xff]
    %v893 = vld [vmem:[#allocation8 + $0x488] sm:$0xff]
    %v894 = vld [vmem:[#allocation8 + $0x490] sm:$0xff]
    %v895 = vld [vmem:[#allocation8 + $0x498] sm:$0xff]
    %v896 = vld [vmem:[#allocation8 + $0x4a0] sm:$0xff]
    %v897 = vld [vmem:[#allocation8 + $0x4a8] sm:$0xff]
    %v898 = vld [vmem:[#allocation8 + $0x4b0] sm:$0xff]
    %v899 = vld [vmem:[#allocation8 + $0x4b8] sm:$0xff]
    %v900 = vld [vmem:[#allocation8 + $0x4c0] sm:$0xff]
    %v901 = vld [vmem:[#allocation8 + $0x4c8] sm:$0xff]
    %v902 = vld [vmem:[#allocation8 + $0x4d0] sm:$0xff]
    %v903 = vld [vmem:[#allocation8 + $0x4d8] sm:$0xff]
    %v904 = vld [vmem:[#allocation8 + $0x4e0] sm:$0xff]
    %v905 = vld [vmem:[#allocation8 + $0x4e8] sm:$0xff]
    %v906 = vld [vmem:[#allocation8 + $0x4f0] sm:$0xff]
    %v907 = vld [vmem:[#allocation8 + $0x4f8] sm:$0xff]
    %v908 = vld [vmem:[#allocation8 + $0x500] sm:$0xff]
    %v909 = vld [vmem:[#allocation8 + $0x508] sm:$0xff]
    %v910 = vld [vmem:[#allocation8 + $0x510] sm:$0xff]
    %v911 = vld [vmem:[#allocation8 + $0x518] sm:$0xff]
    %v912 = vld [vmem:[#allocation8 + $0x520] sm:$0xff]
    %v913 = vld [vmem:[#allocation8 + $0x528] sm:$0xff]
    %v914 = vld [vmem:[#allocation8 + $0x530] sm:$0xff]
    %v915 = vld [vmem:[#allocation8 + $0x538] sm:$0xff]
    %v916 = vld [vmem:[#allocation8 + $0x540] sm:$0xff]
    %v917 = vld [vmem:[#allocation8 + $0x548] sm:$0xff]
    %v918 = vld [vmem:[#allocation8 + $0x550] sm:$0xff]
    %v919 = vld [vmem:[#allocation8 + $0x558] sm:$0xff]
    %v920 = vld [vmem:[#allocation8 + $0x560] sm:$0xff]
    %v921 = vld [vmem:[#allocation8 + $0x568] sm:$0xff]
    %v922 = vld [vmem:[#allocation8 + $0x570] sm:$0xff]
    %v923 = vld [vmem:[#allocation8 + $0x578] sm:$0xff]
    %v924 = vld [vmem:[#allocation8 + $0x580] sm:$0xff]
    %v925 = vld [vmem:[#allocation8 + $0x588] sm:$0xff]
    %v926 = vld [vmem:[#allocation8 + $0x590] sm:$0xff]
    %v927 = vld [vmem:[#allocation8 + $0x598] sm:$0xff]
    %v928 = vld [vmem:[#allocation8 + $0x5a0] sm:$0xff]
    %v929 = vld [vmem:[#allocation8 + $0x5a8] sm:$0xff]
    %v930 = vld [vmem:[#allocation8 + $0x5b0] sm:$0xff]
    %v931 = vld [vmem:[#allocation8 + $0x5b8] sm:$0xff]
    %v932 = vld [vmem:[#allocation8 + $0x5c0] sm:$0xff]
    %v933 = vld [vmem:[#allocation8 + $0x5c8] sm:$0xff]
    %v934 = vld [vmem:[#allocation8 + $0x5d0] sm:$0xff]
    %v935 = vld [vmem:[#allocation8 + $0x5d8] sm:$0xff]
    %v936 = vld [vmem:[#allocation8 + $0x5e0] sm:$0xff]
    %v937 = vld [vmem:[#allocation8 + $0x5e8] sm:$0xff]
    %v938 = vld [vmem:[#allocation8 + $0x5f0] sm:$0xff]
    %v939 = vld [vmem:[#allocation8 + $0x5f8] sm:$0xff]
    %v940 = vld [vmem:[#allocation8 + $0x600] sm:$0xff]
    %v941 = vld [vmem:[#allocation8 + $0x608] sm:$0xff]
    %v942 = vld [vmem:[#allocation8 + $0x610] sm:$0xff]
    %v943 = vld [vmem:[#allocation8 + $0x618] sm:$0xff]
    %v944 = vld [vmem:[#allocation8 + $0x620] sm:$0xff]
    %v945 = vld [vmem:[#allocation8 + $0x628] sm:$0xff]
    %v946 = vld [vmem:[#allocation8 + $0x630] sm:$0xff]
    %v947 = vld [vmem:[#allocation8 + $0x638] sm:$0xff]
    %v948 = vld [vmem:[#allocation8 + $0x640] sm:$0xff]
    %v949 = vld [vmem:[#allocation8 + $0x648] sm:$0xff]
    %v950 = vld [vmem:[#allocation8 + $0x650] sm:$0xff]
    %v951 = vld [vmem:[#allocation8 + $0x658] sm:$0xff]
    %v952 = vld [vmem:[#allocation8 + $0x660] sm:$0xff]
    %v953 = vld [vmem:[#allocation8 + $0x668] sm:$0xff]
    %v954 = vld [vmem:[#allocation8 + $0x670] sm:$0xff]
    %v955 = vld [vmem:[#allocation8 + $0x678] sm:$0xff]
    %v956 = vld [vmem:[#allocation8 + $0x680] sm:$0xff]
    %v957 = vld [vmem:[#allocation8 + $0x688] sm:$0xff]
    %v958 = vld [vmem:[#allocation8 + $0x690] sm:$0xff]
    %v959 = vld [vmem:[#allocation8 + $0x698] sm:$0xff]
    %v960 = vld [vmem:[#allocation8 + $0x6a0] sm:$0xff]
    %v961 = vld [vmem:[#allocation8 + $0x6a8] sm:$0xff]
    %v962 = vld [vmem:[#allocation8 + $0x6b0] sm:$0xff]
    %v963 = vld [vmem:[#allocation8 + $0x6b8] sm:$0xff]
    %v964 = vld [vmem:[#allocation8 + $0x6c0] sm:$0xff]
    %v965 = vld [vmem:[#allocation8 + $0x6c8] sm:$0xff]
    %v966 = vld [vmem:[#allocation8 + $0x6d0] sm:$0xff]
    %v967 = vld [vmem:[#allocation8 + $0x6d8] sm:$0xff]
    %v968 = vld [vmem:[#allocation8 + $0x6e0] sm:$0xff]
    %v969 = vld [vmem:[#allocation8 + $0x6e8] sm:$0xff]
    %v970 = vld [vmem:[#allocation8 + $0x6f0] sm:$0xff]
    %v971 = vld [vmem:[#allocation8 + $0x6f8] sm:$0xff]
    %v972 = vld [vmem:[#allocation8 + $0x700] sm:$0xff]
    %v973 = vld [vmem:[#allocation8 + $0x708] sm:$0xff]
    %v974 = vld [vmem:[#allocation8 + $0x710] sm:$0xff]
    %v975 = vld [vmem:[#allocation8 + $0x718] sm:$0xff]
    %v976 = vld [vmem:[#allocation8 + $0x720] sm:$0xff]
    %v977 = vld [vmem:[#allocation8 + $0x728] sm:$0xff]
    %v978 = vld [vmem:[#allocation8 + $0x730] sm:$0xff]
    %v979 = vld [vmem:[#allocation8 + $0x738] sm:$0xff]
    %v980 = vld [vmem:[#allocation8 + $0x740] sm:$0xff]
    %v981 = vld [vmem:[#allocation8 + $0x748] sm:$0xff]
    %v982 = vld [vmem:[#allocation8 + $0x750] sm:$0xff]
    %v983 = vld [vmem:[#allocation8 + $0x758] sm:$0xff]
    %v984 = vld [vmem:[#allocation8 + $0x760] sm:$0xff]
    %v985 = vld [vmem:[#allocation8 + $0x768] sm:$0xff]
    %v986 = vld [vmem:[#allocation8 + $0x770] sm:$0xff]
    %v987 = vld [vmem:[#allocation8 + $0x778] sm:$0xff]
    %v988 = vld [vmem:[#allocation8 + $0x780] sm:$0xff]
    %v989 = vld [vmem:[#allocation8 + $0x788] sm:$0xff]
    %v990 = vld [vmem:[#allocation8 + $0x790] sm:$0xff]
    %v991 = vld [vmem:[#allocation8 + $0x798] sm:$0xff]
    %v992 = vld [vmem:[#allocation8 + $0x7a0] sm:$0xff]
    %v993 = vld [vmem:[#allocation8 + $0x7a8] sm:$0xff]
    %v994 = vld [vmem:[#allocation8 + $0x7b0] sm:$0xff]
    %v995 = vld [vmem:[#allocation8 + $0x7b8] sm:$0xff]
    %v996 = vld [vmem:[#allocation8 + $0x7c0] sm:$0xff]
    %v997 = vld [vmem:[#allocation8 + $0x7c8] sm:$0xff]
    %v998 = vld [vmem:[#allocation8 + $0x7d0] sm:$0xff]
    %v999 = vld [vmem:[#allocation8 + $0x7d8] sm:$0xff]
    %v1000 = vld [vmem:[#allocation8 + $0x7e0] sm:$0xff]
    %v1001 = vld [vmem:[#allocation8 + $0x7e8] sm:$0xff]
    %v1002 = vld [vmem:[#allocation8 + $0x7f0] sm:$0xff]
    %v1003 = vld [vmem:[#allocation8 + $0x7f8] sm:$0xff]
    %v1004 = vld [vmem:[#allocation10] sm:$0xf]
    %v1006 = vperm.slane %v1004, 0
    %v1007 = vperm.slane %v1004, 1
    %v1008 = vperm.slane %v1004, 2
    %v1009 = vperm.slane %v1004, 3
    %v1270 = vunpack.c.l.b16 %v748
    %v1271 = vunpack.c.h.b16 %v748
    %v1272 = vunpack.c.l.b16 %v749
    %v1273 = vunpack.c.h.b16 %v749
    %v1274 = vunpack.c.l.b16 %v750
    %v1275 = vunpack.c.h.b16 %v750
    %v1276 = vunpack.c.l.b16 %v751
    %v1277 = vunpack.c.h.b16 %v751
    %v1278 = vunpack.c.l.b16 %v752
    %v1279 = vunpack.c.h.b16 %v752
    %v1280 = vunpack.c.l.b16 %v753
    %v1281 = vunpack.c.h.b16 %v753
    %v1282 = vunpack.c.l.b16 %v754
    %v1283 = vunpack.c.h.b16 %v754
    %v1284 = vunpack.c.l.b16 %v755
    %v1285 = vunpack.c.h.b16 %v755
    %v1286 = vunpack.c.l.b16 %v756
    %v1287 = vunpack.c.h.b16 %v756
    %v1288 = vunpack.c.l.b16 %v757
    %v1289 = vunpack.c.h.b16 %v757
    %v1290 = vunpack.c.l.b16 %v758
    %v1291 = vunpack.c.h.b16 %v758
    %v1292 = vunpack.c.l.b16 %v759
    %v1293 = vunpack.c.h.b16 %v759
    %v1294 = vunpack.c.l.b16 %v760
    %v1295 = vunpack.c.h.b16 %v760
    %v1296 = vunpack.c.l.b16 %v761
    %v1297 = vunpack.c.h.b16 %v761
    %v1298 = vunpack.c.l.b16 %v762
    %v1299 = vunpack.c.h.b16 %v762
    %v1300 = vunpack.c.l.b16 %v763
    %v1301 = vunpack.c.h.b16 %v763
    %v1302 = vunpack.c.l.b16 %v764
    %v1303 = vunpack.c.h.b16 %v764
    %v1304 = vunpack.c.l.b16 %v765
    %v1305 = vunpack.c.h.b16 %v765
    %v1306 = vunpack.c.l.b16 %v766
    %v1307 = vunpack.c.h.b16 %v766
    %v1308 = vunpack.c.l.b16 %v767
    %v1309 = vunpack.c.h.b16 %v767
    %v1310 = vunpack.c.l.b16 %v768
    %v1311 = vunpack.c.h.b16 %v768
    %v1312 = vunpack.c.l.b16 %v769
    %v1313 = vunpack.c.h.b16 %v769
    %v1314 = vunpack.c.l.b16 %v770
    %v1315 = vunpack.c.h.b16 %v770
    %v1316 = vunpack.c.l.b16 %v771
    %v1317 = vunpack.c.h.b16 %v771
    %v1318 = vunpack.c.l.b16 %v772
    %v1319 = vunpack.c.h.b16 %v772
    %v1320 = vunpack.c.l.b16 %v773
    %v1321 = vunpack.c.h.b16 %v773
    %v1322 = vunpack.c.l.b16 %v774
    %v1323 = vunpack.c.h.b16 %v774
    %v1324 = vunpack.c.l.b16 %v775
    %v1325 = vunpack.c.h.b16 %v775
    %v1326 = vunpack.c.l.b16 %v776
    %v1327 = vunpack.c.h.b16 %v776
    %v1328 = vunpack.c.l.b16 %v777
    %v1329 = vunpack.c.h.b16 %v777
    %v1330 = vunpack.c.l.b16 %v778
    %v1331 = vunpack.c.h.b16 %v778
    %v1332 = vunpack.c.l.b16 %v779
    %v1333 = vunpack.c.h.b16 %v779
    %v1334 = vunpack.c.l.b16 %v780
    %v1335 = vunpack.c.h.b16 %v780
    %v1336 = vunpack.c.l.b16 %v781
    %v1337 = vunpack.c.h.b16 %v781
    %v1338 = vunpack.c.l.b16 %v782
    %v1339 = vunpack.c.h.b16 %v782
    %v1340 = vunpack.c.l.b16 %v783
    %v1341 = vunpack.c.h.b16 %v783
    %v1342 = vunpack.c.l.b16 %v784
    %v1343 = vunpack.c.h.b16 %v784
    %v1344 = vunpack.c.l.b16 %v785
    %v1345 = vunpack.c.h.b16 %v785
    %v1346 = vunpack.c.l.b16 %v786
    %v1347 = vunpack.c.h.b16 %v786
    %v1348 = vunpack.c.l.b16 %v787
    %v1349 = vunpack.c.h.b16 %v787
    %v1350 = vunpack.c.l.b16 %v788
    %v1351 = vunpack.c.h.b16 %v788
    %v1352 = vunpack.c.l.b16 %v789
    %v1353 = vunpack.c.h.b16 %v789
    %v1354 = vunpack.c.l.b16 %v790
    %v1355 = vunpack.c.h.b16 %v790
    %v1356 = vunpack.c.l.b16 %v791
    %v1357 = vunpack.c.h.b16 %v791
    %v1358 = vunpack.c.l.b16 %v792
    %v1359 = vunpack.c.h.b16 %v792
    %v1360 = vunpack.c.l.b16 %v793
    %v1361 = vunpack.c.h.b16 %v793
    %v1362 = vunpack.c.l.b16 %v794
    %v1363 = vunpack.c.h.b16 %v794
    %v1364 = vunpack.c.l.b16 %v795
    %v1365 = vunpack.c.h.b16 %v795
    %v1366 = vunpack.c.l.b16 %v796
    %v1367 = vunpack.c.h.b16 %v796
    %v1368 = vunpack.c.l.b16 %v797
    %v1369 = vunpack.c.h.b16 %v797
    %v1370 = vunpack.c.l.b16 %v798
    %v1371 = vunpack.c.h.b16 %v798
    %v1372 = vunpack.c.l.b16 %v799
    %v1373 = vunpack.c.h.b16 %v799
    %v1374 = vunpack.c.l.b16 %v800
    %v1375 = vunpack.c.h.b16 %v800
    %v1376 = vunpack.c.l.b16 %v801
    %v1377 = vunpack.c.h.b16 %v801
    %v1378 = vunpack.c.l.b16 %v802
    %v1379 = vunpack.c.h.b16 %v802
    %v1380 = vunpack.c.l.b16 %v803
    %v1381 = vunpack.c.h.b16 %v803
    %v1382 = vunpack.c.l.b16 %v804
    %v1383 = vunpack.c.h.b16 %v804
    %v1384 = vunpack.c.l.b16 %v805
    %v1385 = vunpack.c.h.b16 %v805
    %v1386 = vunpack.c.l.b16 %v806
    %v1387 = vunpack.c.h.b16 %v806
    %v1388 = vunpack.c.l.b16 %v807
    %v1389 = vunpack.c.h.b16 %v807
    %v1390 = vunpack.c.l.b16 %v808
    %v1391 = vunpack.c.h.b16 %v808
    %v1392 = vunpack.c.l.b16 %v809
    %v1393 = vunpack.c.h.b16 %v809
    %v1394 = vunpack.c.l.b16 %v810
    %v1395 = vunpack.c.h.b16 %v810
    %v1396 = vunpack.c.l.b16 %v811
    %v1397 = vunpack.c.h.b16 %v811
    %v1398 = vunpack.c.l.b16 %v812
    %v1399 = vunpack.c.h.b16 %v812
    %v1400 = vunpack.c.l.b16 %v813
    %v1401 = vunpack.c.h.b16 %v813
    %v1402 = vunpack.c.l.b16 %v814
    %v1403 = vunpack.c.h.b16 %v814
    %v1404 = vunpack.c.l.b16 %v815
    %v1405 = vunpack.c.h.b16 %v815
    %v1406 = vunpack.c.l.b16 %v816
    %v1407 = vunpack.c.h.b16 %v816
    %v1408 = vunpack.c.l.b16 %v817
    %v1409 = vunpack.c.h.b16 %v817
    %v1410 = vunpack.c.l.b16 %v818
    %v1411 = vunpack.c.h.b16 %v818
    %v1412 = vunpack.c.l.b16 %v819
    %v1413 = vunpack.c.h.b16 %v819
    %v1414 = vunpack.c.l.b16 %v820
    %v1415 = vunpack.c.h.b16 %v820
    %v1416 = vunpack.c.l.b16 %v821
    %v1417 = vunpack.c.h.b16 %v821
    %v1418 = vunpack.c.l.b16 %v822
    %v1419 = vunpack.c.h.b16 %v822
    %v1420 = vunpack.c.l.b16 %v823
    %v1421 = vunpack.c.h.b16 %v823
    %v1422 = vunpack.c.l.b16 %v824
    %v1423 = vunpack.c.h.b16 %v824
    %v1424 = vunpack.c.l.b16 %v825
    %v1425 = vunpack.c.h.b16 %v825
    %v1426 = vunpack.c.l.b16 %v826
    %v1427 = vunpack.c.h.b16 %v826
    %v1428 = vunpack.c.l.b16 %v827
    %v1429 = vunpack.c.h.b16 %v827
    %v1430 = vunpack.c.l.b16 %v828
    %v1431 = vunpack.c.h.b16 %v828
    %v1432 = vunpack.c.l.b16 %v829
    %v1433 = vunpack.c.h.b16 %v829
    %v1434 = vunpack.c.l.b16 %v830
    %v1435 = vunpack.c.h.b16 %v830
    %v1436 = vunpack.c.l.b16 %v831
    %v1437 = vunpack.c.h.b16 %v831
    %v1438 = vunpack.c.l.b16 %v832
    %v1439 = vunpack.c.h.b16 %v832
    %v1440 = vunpack.c.l.b16 %v833
    %v1441 = vunpack.c.h.b16 %v833
    %v1442 = vunpack.c.l.b16 %v834
    %v1443 = vunpack.c.h.b16 %v834
    %v1444 = vunpack.c.l.b16 %v835
    %v1445 = vunpack.c.h.b16 %v835
    %v1446 = vunpack.c.l.b16 %v836
    %v1447 = vunpack.c.h.b16 %v836
    %v1448 = vunpack.c.l.b16 %v837
    %v1449 = vunpack.c.h.b16 %v837
    %v1450 = vunpack.c.l.b16 %v838
    %v1451 = vunpack.c.h.b16 %v838
    %v1452 = vunpack.c.l.b16 %v839
    %v1453 = vunpack.c.h.b16 %v839
    %v1454 = vunpack.c.l.b16 %v840
    %v1455 = vunpack.c.h.b16 %v840
    %v1456 = vunpack.c.l.b16 %v841
    %v1457 = vunpack.c.h.b16 %v841
    %v1458 = vunpack.c.l.b16 %v842
    %v1459 = vunpack.c.h.b16 %v842
    %v1460 = vunpack.c.l.b16 %v843
    %v1461 = vunpack.c.h.b16 %v843
    %v1462 = vunpack.c.l.b16 %v844
    %v1463 = vunpack.c.h.b16 %v844
    %v1464 = vunpack.c.l.b16 %v845
    %v1465 = vunpack.c.h.b16 %v845
    %v1466 = vunpack.c.l.b16 %v846
    %v1467 = vunpack.c.h.b16 %v846
    %v1468 = vunpack.c.l.b16 %v847
    %v1469 = vunpack.c.h.b16 %v847
    %v1470 = vunpack.c.l.b16 %v848
    %v1471 = vunpack.c.h.b16 %v848
    %v1472 = vunpack.c.l.b16 %v849
    %v1473 = vunpack.c.h.b16 %v849
    %v1474 = vunpack.c.l.b16 %v850
    %v1475 = vunpack.c.h.b16 %v850
    %v1476 = vunpack.c.l.b16 %v851
    %v1477 = vunpack.c.h.b16 %v851
    %v1478 = vunpack.c.l.b16 %v852
    %v1479 = vunpack.c.h.b16 %v852
    %v1480 = vunpack.c.l.b16 %v853
    %v1481 = vunpack.c.h.b16 %v853
    %v1482 = vunpack.c.l.b16 %v854
    %v1483 = vunpack.c.h.b16 %v854
    %v1484 = vunpack.c.l.b16 %v855
    %v1485 = vunpack.c.h.b16 %v855
    %v1486 = vunpack.c.l.b16 %v856
    %v1487 = vunpack.c.h.b16 %v856
    %v1488 = vunpack.c.l.b16 %v857
    %v1489 = vunpack.c.h.b16 %v857
    %v1490 = vunpack.c.l.b16 %v858
    %v1491 = vunpack.c.h.b16 %v858
    %v1492 = vunpack.c.l.b16 %v859
    %v1493 = vunpack.c.h.b16 %v859
    %v1494 = vunpack.c.l.b16 %v860
    %v1495 = vunpack.c.h.b16 %v860
    %v1496 = vunpack.c.l.b16 %v861
    %v1497 = vunpack.c.h.b16 %v861
    %v1498 = vunpack.c.l.b16 %v862
    %v1499 = vunpack.c.h.b16 %v862
    %v1500 = vunpack.c.l.b16 %v863
    %v1501 = vunpack.c.h.b16 %v863
    %v1502 = vunpack.c.l.b16 %v864
    %v1503 = vunpack.c.h.b16 %v864
    %v1504 = vunpack.c.l.b16 %v865
    %v1505 = vunpack.c.h.b16 %v865
    %v1506 = vunpack.c.l.b16 %v866
    %v1507 = vunpack.c.h.b16 %v866
    %v1508 = vunpack.c.l.b16 %v867
    %v1509 = vunpack.c.h.b16 %v867
    %v1510 = vunpack.c.l.b16 %v868
    %v1511 = vunpack.c.h.b16 %v868
    %v1512 = vunpack.c.l.b16 %v869
    %v1513 = vunpack.c.h.b16 %v869
    %v1514 = vunpack.c.l.b16 %v870
    %v1515 = vunpack.c.h.b16 %v870
    %v1516 = vunpack.c.l.b16 %v871
    %v1517 = vunpack.c.h.b16 %v871
    %v1518 = vunpack.c.l.b16 %v872
    %v1519 = vunpack.c.h.b16 %v872
    %v1520 = vunpack.c.l.b16 %v873
    %v1521 = vunpack.c.h.b16 %v873
    %v1522 = vunpack.c.l.b16 %v874
    %v1523 = vunpack.c.h.b16 %v874
    %v1524 = vunpack.c.l.b16 %v875
    %v1525 = vunpack.c.h.b16 %v875
    %v1526 = vunpack.c.l.b16 %v876
    %v1527 = vunpack.c.h.b16 %v876
    %v1528 = vunpack.c.l.b16 %v877
    %v1529 = vunpack.c.h.b16 %v877
    %v1530 = vunpack.c.l.b16 %v878
    %v1531 = vunpack.c.h.b16 %v878
    %v1532 = vunpack.c.l.b16 %v879
    %v1533 = vunpack.c.h.b16 %v879
    %v1534 = vunpack.c.l.b16 %v880
    %v1535 = vunpack.c.h.b16 %v880
    %v1536 = vunpack.c.l.b16 %v881
    %v1537 = vunpack.c.h.b16 %v881
    %v1538 = vunpack.c.l.b16 %v882
    %v1539 = vunpack.c.h.b16 %v882
    %v1540 = vunpack.c.l.b16 %v883
    %v1541 = vunpack.c.h.b16 %v883
    %v1542 = vunpack.c.l.b16 %v884
    %v1543 = vunpack.c.h.b16 %v884
    %v1544 = vunpack.c.l.b16 %v885
    %v1545 = vunpack.c.h.b16 %v885
    %v1546 = vunpack.c.l.b16 %v886
    %v1547 = vunpack.c.h.b16 %v886
    %v1548 = vunpack.c.l.b16 %v887
    %v1549 = vunpack.c.h.b16 %v887
    %v1550 = vunpack.c.l.b16 %v888
    %v1551 = vunpack.c.h.b16 %v888
    %v1552 = vunpack.c.l.b16 %v889
    %v1553 = vunpack.c.h.b16 %v889
    %v1554 = vunpack.c.l.b16 %v890
    %v1555 = vunpack.c.h.b16 %v890
    %v1556 = vunpack.c.l.b16 %v891
    %v1557 = vunpack.c.h.b16 %v891
    %v1558 = vunpack.c.l.b16 %v892
    %v1559 = vunpack.c.h.b16 %v892
    %v1560 = vunpack.c.l.b16 %v893
    %v1561 = vunpack.c.h.b16 %v893
    %v1562 = vunpack.c.l.b16 %v894
    %v1563 = vunpack.c.h.b16 %v894
    %v1564 = vunpack.c.l.b16 %v895
    %v1565 = vunpack.c.h.b16 %v895
    %v1566 = vunpack.c.l.b16 %v896
    %v1567 = vunpack.c.h.b16 %v896
    %v1568 = vunpack.c.l.b16 %v897
    %v1569 = vunpack.c.h.b16 %v897
    %v1570 = vunpack.c.l.b16 %v898
    %v1571 = vunpack.c.h.b16 %v898
    %v1572 = vunpack.c.l.b16 %v899
    %v1573 = vunpack.c.h.b16 %v899
    %v1574 = vunpack.c.l.b16 %v900
    %v1575 = vunpack.c.h.b16 %v900
    %v1576 = vunpack.c.l.b16 %v901
    %v1577 = vunpack.c.h.b16 %v901
    %v1578 = vunpack.c.l.b16 %v902
    %v1579 = vunpack.c.h.b16 %v902
    %v1580 = vunpack.c.l.b16 %v903
    %v1581 = vunpack.c.h.b16 %v903
    %v1582 = vunpack.c.l.b16 %v904
    %v1583 = vunpack.c.h.b16 %v904
    %v1584 = vunpack.c.l.b16 %v905
    %v1585 = vunpack.c.h.b16 %v905
    %v1586 = vunpack.c.l.b16 %v906
    %v1587 = vunpack.c.h.b16 %v906
    %v1588 = vunpack.c.l.b16 %v907
    %v1589 = vunpack.c.h.b16 %v907
    %v1590 = vunpack.c.l.b16 %v908
    %v1591 = vunpack.c.h.b16 %v908
    %v1592 = vunpack.c.l.b16 %v909
    %v1593 = vunpack.c.h.b16 %v909
    %v1594 = vunpack.c.l.b16 %v910
    %v1595 = vunpack.c.h.b16 %v910
    %v1596 = vunpack.c.l.b16 %v911
    %v1597 = vunpack.c.h.b16 %v911
    %v1598 = vunpack.c.l.b16 %v912
    %v1599 = vunpack.c.h.b16 %v912
    %v1600 = vunpack.c.l.b16 %v913
    %v1601 = vunpack.c.h.b16 %v913
    %v1602 = vunpack.c.l.b16 %v914
    %v1603 = vunpack.c.h.b16 %v914
    %v1604 = vunpack.c.l.b16 %v915
    %v1605 = vunpack.c.h.b16 %v915
    %v1606 = vunpack.c.l.b16 %v916
    %v1607 = vunpack.c.h.b16 %v916
    %v1608 = vunpack.c.l.b16 %v917
    %v1609 = vunpack.c.h.b16 %v917
    %v1610 = vunpack.c.l.b16 %v918
    %v1611 = vunpack.c.h.b16 %v918
    %v1612 = vunpack.c.l.b16 %v919
    %v1613 = vunpack.c.h.b16 %v919
    %v1614 = vunpack.c.l.b16 %v920
    %v1615 = vunpack.c.h.b16 %v920
    %v1616 = vunpack.c.l.b16 %v921
    %v1617 = vunpack.c.h.b16 %v921
    %v1618 = vunpack.c.l.b16 %v922
    %v1619 = vunpack.c.h.b16 %v922
    %v1620 = vunpack.c.l.b16 %v923
    %v1621 = vunpack.c.h.b16 %v923
    %v1622 = vunpack.c.l.b16 %v924
    %v1623 = vunpack.c.h.b16 %v924
    %v1624 = vunpack.c.l.b16 %v925
    %v1625 = vunpack.c.h.b16 %v925
    %v1626 = vunpack.c.l.b16 %v926
    %v1627 = vunpack.c.h.b16 %v926
    %v1628 = vunpack.c.l.b16 %v927
    %v1629 = vunpack.c.h.b16 %v927
    %v1630 = vunpack.c.l.b16 %v928
    %v1631 = vunpack.c.h.b16 %v928
    %v1632 = vunpack.c.l.b16 %v929
    %v1633 = vunpack.c.h.b16 %v929
    %v1634 = vunpack.c.l.b16 %v930
    %v1635 = vunpack.c.h.b16 %v930
    %v1636 = vunpack.c.l.b16 %v931
    %v1637 = vunpack.c.h.b16 %v931
    %v1638 = vunpack.c.l.b16 %v932
    %v1639 = vunpack.c.h.b16 %v932
    %v1640 = vunpack.c.l.b16 %v933
    %v1641 = vunpack.c.h.b16 %v933
    %v1642 = vunpack.c.l.b16 %v934
    %v1643 = vunpack.c.h.b16 %v934
    %v1644 = vunpack.c.l.b16 %v935
    %v1645 = vunpack.c.h.b16 %v935
    %v1646 = vunpack.c.l.b16 %v936
    %v1647 = vunpack.c.h.b16 %v936
    %v1648 = vunpack.c.l.b16 %v937
    %v1649 = vunpack.c.h.b16 %v937
    %v1650 = vunpack.c.l.b16 %v938
    %v1651 = vunpack.c.h.b16 %v938
    %v1652 = vunpack.c.l.b16 %v939
    %v1653 = vunpack.c.h.b16 %v939
    %v1654 = vunpack.c.l.b16 %v940
    %v1655 = vunpack.c.h.b16 %v940
    %v1656 = vunpack.c.l.b16 %v941
    %v1657 = vunpack.c.h.b16 %v941
    %v1658 = vunpack.c.l.b16 %v942
    %v1659 = vunpack.c.h.b16 %v942
    %v1660 = vunpack.c.l.b16 %v943
    %v1661 = vunpack.c.h.b16 %v943
    %v1662 = vunpack.c.l.b16 %v944
    %v1663 = vunpack.c.h.b16 %v944
    %v1664 = vunpack.c.l.b16 %v945
    %v1665 = vunpack.c.h.b16 %v945
    %v1666 = vunpack.c.l.b16 %v946
    %v1667 = vunpack.c.h.b16 %v946
    %v1668 = vunpack.c.l.b16 %v947
    %v1669 = vunpack.c.h.b16 %v947
    %v1670 = vunpack.c.l.b16 %v948
    %v1671 = vunpack.c.h.b16 %v948
    %v1672 = vunpack.c.l.b16 %v949
    %v1673 = vunpack.c.h.b16 %v949
    %v1674 = vunpack.c.l.b16 %v950
    %v1675 = vunpack.c.h.b16 %v950
    %v1676 = vunpack.c.l.b16 %v951
    %v1677 = vunpack.c.h.b16 %v951
    %v1678 = vunpack.c.l.b16 %v952
    %v1679 = vunpack.c.h.b16 %v952
    %v1680 = vunpack.c.l.b16 %v953
    %v1681 = vunpack.c.h.b16 %v953
    %v1682 = vunpack.c.l.b16 %v954
    %v1683 = vunpack.c.h.b16 %v954
    %v1684 = vunpack.c.l.b16 %v955
    %v1685 = vunpack.c.h.b16 %v955
    %v1686 = vunpack.c.l.b16 %v956
    %v1687 = vunpack.c.h.b16 %v956
    %v1688 = vunpack.c.l.b16 %v957
    %v1689 = vunpack.c.h.b16 %v957
    %v1690 = vunpack.c.l.b16 %v958
    %v1691 = vunpack.c.h.b16 %v958
    %v1692 = vunpack.c.l.b16 %v959
    %v1693 = vunpack.c.h.b16 %v959
    %v1694 = vunpack.c.l.b16 %v960
    %v1695 = vunpack.c.h.b16 %v960
    %v1696 = vunpack.c.l.b16 %v961
    %v1697 = vunpack.c.h.b16 %v961
    %v1698 = vunpack.c.l.b16 %v962
    %v1699 = vunpack.c.h.b16 %v962
    %v1700 = vunpack.c.l.b16 %v963
    %v1701 = vunpack.c.h.b16 %v963
    %v1702 = vunpack.c.l.b16 %v964
    %v1703 = vunpack.c.h.b16 %v964
    %v1704 = vunpack.c.l.b16 %v965
    %v1705 = vunpack.c.h.b16 %v965
    %v1706 = vunpack.c.l.b16 %v966
    %v1707 = vunpack.c.h.b16 %v966
    %v1708 = vunpack.c.l.b16 %v967
    %v1709 = vunpack.c.h.b16 %v967
    %v1710 = vunpack.c.l.b16 %v968
    %v1711 = vunpack.c.h.b16 %v968
    %v1712 = vunpack.c.l.b16 %v969
    %v1713 = vunpack.c.h.b16 %v969
    %v1714 = vunpack.c.l.b16 %v970
    %v1715 = vunpack.c.h.b16 %v970
    %v1716 = vunpack.c.l.b16 %v971
    %v1717 = vunpack.c.h.b16 %v971
    %v1718 = vunpack.c.l.b16 %v972
    %v1719 = vunpack.c.h.b16 %v972
    %v1720 = vunpack.c.l.b16 %v973
    %v1721 = vunpack.c.h.b16 %v973
    %v1722 = vunpack.c.l.b16 %v974
    %v1723 = vunpack.c.h.b16 %v974
    %v1724 = vunpack.c.l.b16 %v975
    %v1725 = vunpack.c.h.b16 %v975
    %v1726 = vunpack.c.l.b16 %v976
    %v1727 = vunpack.c.h.b16 %v976
    %v1728 = vunpack.c.l.b16 %v977
    %v1729 = vunpack.c.h.b16 %v977
    %v1730 = vunpack.c.l.b16 %v978
    %v1731 = vunpack.c.h.b16 %v978
    %v1732 = vunpack.c.l.b16 %v979
    %v1733 = vunpack.c.h.b16 %v979
    %v1734 = vunpack.c.l.b16 %v980
    %v1735 = vunpack.c.h.b16 %v980
    %v1736 = vunpack.c.l.b16 %v981
    %v1737 = vunpack.c.h.b16 %v981
    %v1738 = vunpack.c.l.b16 %v982
    %v1739 = vunpack.c.h.b16 %v982
    %v1740 = vunpack.c.l.b16 %v983
    %v1741 = vunpack.c.h.b16 %v983
    %v1742 = vunpack.c.l.b16 %v984
    %v1743 = vunpack.c.h.b16 %v984
    %v1744 = vunpack.c.l.b16 %v985
    %v1745 = vunpack.c.h.b16 %v985
    %v1746 = vunpack.c.l.b16 %v986
    %v1747 = vunpack.c.h.b16 %v986
    %v1748 = vunpack.c.l.b16 %v987
    %v1749 = vunpack.c.h.b16 %v987
    %v1750 = vunpack.c.l.b16 %v988
    %v1751 = vunpack.c.h.b16 %v988
    %v1752 = vunpack.c.l.b16 %v989
    %v1753 = vunpack.c.h.b16 %v989
    %v1754 = vunpack.c.l.b16 %v990
    %v1755 = vunpack.c.h.b16 %v990
    %v1756 = vunpack.c.l.b16 %v991
    %v1757 = vunpack.c.h.b16 %v991
    %v1758 = vunpack.c.l.b16 %v992
    %v1759 = vunpack.c.h.b16 %v992
    %v1760 = vunpack.c.l.b16 %v993
    %v1761 = vunpack.c.h.b16 %v993
    %v1762 = vunpack.c.l.b16 %v994
    %v1763 = vunpack.c.h.b16 %v994
    %v1764 = vunpack.c.l.b16 %v995
    %v1765 = vunpack.c.h.b16 %v995
    %v1766 = vunpack.c.l.b16 %v996
    %v1767 = vunpack.c.h.b16 %v996
    %v1768 = vunpack.c.l.b16 %v997
    %v1769 = vunpack.c.h.b16 %v997
    %v1770 = vunpack.c.l.b16 %v998
    %v1771 = vunpack.c.h.b16 %v998
    %v1772 = vunpack.c.l.b16 %v999
    %v1773 = vunpack.c.h.b16 %v999
    %v1774 = vunpack.c.l.b16 %v1000
    %v1775 = vunpack.c.h.b16 %v1000
    %v1776 = vunpack.c.l.b16 %v1001
    %v1777 = vunpack.c.h.b16 %v1001
    %v1778 = vunpack.c.l.b16 %v1002
    %v1779 = vunpack.c.h.b16 %v1002
    %v1780 = vunpack.c.l.b16 %v1003
    %v1781 = vunpack.c.h.b16 %v1003
    %v1782 = vpack.c.b16 %v1274, %v1270
    %v1783 = vpack.c.b16 %v1275, %v1271
    %v1784 = vpack.c.b16 %v1276, %v1272
    %v1785 = vpack.c.b16 %v1277, %v1273
    %v1786 = vpack.c.b16 %v1282, %v1278
    %v1787 = vpack.c.b16 %v1283, %v1279
    %v1788 = vpack.c.b16 %v1284, %v1280
    %v1789 = vpack.c.b16 %v1285, %v1281
    %v1790 = vpack.c.b16 %v1290, %v1286
    %v1791 = vpack.c.b16 %v1291, %v1287
    %v1792 = vpack.c.b16 %v1292, %v1288
    %v1793 = vpack.c.b16 %v1293, %v1289
    %v1794 = vpack.c.b16 %v1298, %v1294
    %v1795 = vpack.c.b16 %v1299, %v1295
    %v1796 = vpack.c.b16 %v1300, %v1296
    %v1797 = vpack.c.b16 %v1301, %v1297
    %v1798 = vpack.c.b16 %v1306, %v1302
    %v1799 = vpack.c.b16 %v1307, %v1303
    %v1800 = vpack.c.b16 %v1308, %v1304
    %v1801 = vpack.c.b16 %v1309, %v1305
    %v1802 = vpack.c.b16 %v1314, %v1310
    %v1803 = vpack.c.b16 %v1315, %v1311
    %v1804 = vpack.c.b16 %v1316, %v1312
    %v1805 = vpack.c.b16 %v1317, %v1313
    %v1806 = vpack.c.b16 %v1322, %v1318
    %v1807 = vpack.c.b16 %v1323, %v1319
    %v1808 = vpack.c.b16 %v1324, %v1320
    %v1809 = vpack.c.b16 %v1325, %v1321
    %v1810 = vpack.c.b16 %v1330, %v1326
    %v1811 = vpack.c.b16 %v1331, %v1327
    %v1812 = vpack.c.b16 %v1332, %v1328
    %v1813 = vpack.c.b16 %v1333, %v1329
    %v1814 = vpack.c.b16 %v1338, %v1334
    %v1815 = vpack.c.b16 %v1339, %v1335
    %v1816 = vpack.c.b16 %v1340, %v1336
    %v1817 = vpack.c.b16 %v1341, %v1337
    %v1818 = vpack.c.b16 %v1346, %v1342
    %v1819 = vpack.c.b16 %v1347, %v1343
    %v1820 = vpack.c.b16 %v1348, %v1344
    %v1821 = vpack.c.b16 %v1349, %v1345
    %v1822 = vpack.c.b16 %v1354, %v1350
    %v1823 = vpack.c.b16 %v1355, %v1351
    %v1824 = vpack.c.b16 %v1356, %v1352
    %v1825 = vpack.c.b16 %v1357, %v1353
    %v1826 = vpack.c.b16 %v1362, %v1358
    %v1827 = vpack.c.b16 %v1363, %v1359
    %v1828 = vpack.c.b16 %v1364, %v1360
    %v1829 = vpack.c.b16 %v1365, %v1361
    %v1830 = vpack.c.b16 %v1370, %v1366
    %v1831 = vpack.c.b16 %v1371, %v1367
    %v1832 = vpack.c.b16 %v1372, %v1368
    %v1833 = vpack.c.b16 %v1373, %v1369
    %v1834 = vpack.c.b16 %v1378, %v1374
    %v1835 = vpack.c.b16 %v1379, %v1375
    %v1836 = vpack.c.b16 %v1380, %v1376
    %v1837 = vpack.c.b16 %v1381, %v1377
    %v1838 = vpack.c.b16 %v1386, %v1382
    %v1839 = vpack.c.b16 %v1387, %v1383
    %v1840 = vpack.c.b16 %v1388, %v1384
    %v1841 = vpack.c.b16 %v1389, %v1385
    %v1842 = vpack.c.b16 %v1394, %v1390
    %v1843 = vpack.c.b16 %v1395, %v1391
    %v1844 = vpack.c.b16 %v1396, %v1392
    %v1845 = vpack.c.b16 %v1397, %v1393
    %v1846 = vpack.c.b16 %v1402, %v1398
    %v1847 = vpack.c.b16 %v1403, %v1399
    %v1848 = vpack.c.b16 %v1404, %v1400
    %v1849 = vpack.c.b16 %v1405, %v1401
    %v1850 = vpack.c.b16 %v1410, %v1406
    %v1851 = vpack.c.b16 %v1411, %v1407
    %v1852 = vpack.c.b16 %v1412, %v1408
    %v1853 = vpack.c.b16 %v1413, %v1409
    %v1854 = vpack.c.b16 %v1418, %v1414
    %v1855 = vpack.c.b16 %v1419, %v1415
    %v1856 = vpack.c.b16 %v1420, %v1416
    %v1857 = vpack.c.b16 %v1421, %v1417
    %v1858 = vpack.c.b16 %v1426, %v1422
    %v1859 = vpack.c.b16 %v1427, %v1423
    %v1860 = vpack.c.b16 %v1428, %v1424
    %v1861 = vpack.c.b16 %v1429, %v1425
    %v1862 = vpack.c.b16 %v1434, %v1430
    %v1863 = vpack.c.b16 %v1435, %v1431
    %v1864 = vpack.c.b16 %v1436, %v1432
    %v1865 = vpack.c.b16 %v1437, %v1433
    %v1866 = vpack.c.b16 %v1442, %v1438
    %v1867 = vpack.c.b16 %v1443, %v1439
    %v1868 = vpack.c.b16 %v1444, %v1440
    %v1869 = vpack.c.b16 %v1445, %v1441
    %v1870 = vpack.c.b16 %v1450, %v1446
    %v1871 = vpack.c.b16 %v1451, %v1447
    %v1872 = vpack.c.b16 %v1452, %v1448
    %v1873 = vpack.c.b16 %v1453, %v1449
    %v1874 = vpack.c.b16 %v1458, %v1454
    %v1875 = vpack.c.b16 %v1459, %v1455
    %v1876 = vpack.c.b16 %v1460, %v1456
    %v1877 = vpack.c.b16 %v1461, %v1457
    %v1878 = vpack.c.b16 %v1466, %v1462
    %v1879 = vpack.c.b16 %v1467, %v1463
    %v1880 = vpack.c.b16 %v1468, %v1464
    %v1881 = vpack.c.b16 %v1469, %v1465
    %v1882 = vpack.c.b16 %v1474, %v1470
    %v1883 = vpack.c.b16 %v1475, %v1471
    %v1884 = vpack.c.b16 %v1476, %v1472
    %v1885 = vpack.c.b16 %v1477, %v1473
    %v1886 = vpack.c.b16 %v1482, %v1478
    %v1887 = vpack.c.b16 %v1483, %v1479
    %v1888 = vpack.c.b16 %v1484, %v1480
    %v1889 = vpack.c.b16 %v1485, %v1481
    %v1890 = vpack.c.b16 %v1490, %v1486
    %v1891 = vpack.c.b16 %v1491, %v1487
    %v1892 = vpack.c.b16 %v1492, %v1488
    %v1893 = vpack.c.b16 %v1493, %v1489
    %v1894 = vpack.c.b16 %v1498, %v1494
    %v1895 = vpack.c.b16 %v1499, %v1495
    %v1896 = vpack.c.b16 %v1500, %v1496
    %v1897 = vpack.c.b16 %v1501, %v1497
    %v1898 = vpack.c.b16 %v1506, %v1502
    %v1899 = vpack.c.b16 %v1507, %v1503
    %v1900 = vpack.c.b16 %v1508, %v1504
    %v1901 = vpack.c.b16 %v1509, %v1505
    %v1902 = vpack.c.b16 %v1514, %v1510
    %v1903 = vpack.c.b16 %v1515, %v1511
    %v1904 = vpack.c.b16 %v1516, %v1512
    %v1905 = vpack.c.b16 %v1517, %v1513
    %v1906 = vpack.c.b16 %v1522, %v1518
    %v1907 = vpack.c.b16 %v1523, %v1519
    %v1908 = vpack.c.b16 %v1524, %v1520
    %v1909 = vpack.c.b16 %v1525, %v1521
    %v1910 = vpack.c.b16 %v1530, %v1526
    %v1911 = vpack.c.b16 %v1531, %v1527
    %v1912 = vpack.c.b16 %v1532, %v1528
    %v1913 = vpack.c.b16 %v1533, %v1529
    %v1914 = vpack.c.b16 %v1538, %v1534
    %v1915 = vpack.c.b16 %v1539, %v1535
    %v1916 = vpack.c.b16 %v1540, %v1536
    %v1917 = vpack.c.b16 %v1541, %v1537
    %v1918 = vpack.c.b16 %v1546, %v1542
    %v1919 = vpack.c.b16 %v1547, %v1543
    %v1920 = vpack.c.b16 %v1548, %v1544
    %v1921 = vpack.c.b16 %v1549, %v1545
    %v1922 = vpack.c.b16 %v1554, %v1550
    %v1923 = vpack.c.b16 %v1555, %v1551
    %v1924 = vpack.c.b16 %v1556, %v1552
    %v1925 = vpack.c.b16 %v1557, %v1553
    %v1926 = vpack.c.b16 %v1562, %v1558
    %v1927 = vpack.c.b16 %v1563, %v1559
    %v1928 = vpack.c.b16 %v1564, %v1560
    %v1929 = vpack.c.b16 %v1565, %v1561
    %v1930 = vpack.c.b16 %v1570, %v1566
    %v1931 = vpack.c.b16 %v1571, %v1567
    %v1932 = vpack.c.b16 %v1572, %v1568
    %v1933 = vpack.c.b16 %v1573, %v1569
    %v1934 = vpack.c.b16 %v1578, %v1574
    %v1935 = vpack.c.b16 %v1579, %v1575
    %v1936 = vpack.c.b16 %v1580, %v1576
    %v1937 = vpack.c.b16 %v1581, %v1577
    %v1938 = vpack.c.b16 %v1586, %v1582
    %v1939 = vpack.c.b16 %v1587, %v1583
    %v1940 = vpack.c.b16 %v1588, %v1584
    %v1941 = vpack.c.b16 %v1589, %v1585
    %v1942 = vpack.c.b16 %v1594, %v1590
    %v1943 = vpack.c.b16 %v1595, %v1591
    %v1944 = vpack.c.b16 %v1596, %v1592
    %v1945 = vpack.c.b16 %v1597, %v1593
    %v1946 = vpack.c.b16 %v1602, %v1598
    %v1947 = vpack.c.b16 %v1603, %v1599
    %v1948 = vpack.c.b16 %v1604, %v1600
    %v1949 = vpack.c.b16 %v1605, %v1601
    %v1950 = vpack.c.b16 %v1610, %v1606
    %v1951 = vpack.c.b16 %v1611, %v1607
    %v1952 = vpack.c.b16 %v1612, %v1608
    %v1953 = vpack.c.b16 %v1613, %v1609
    %v1954 = vpack.c.b16 %v1618, %v1614
    %v1955 = vpack.c.b16 %v1619, %v1615
    %v1956 = vpack.c.b16 %v1620, %v1616
    %v1957 = vpack.c.b16 %v1621, %v1617
    %v1958 = vpack.c.b16 %v1626, %v1622
    %v1959 = vpack.c.b16 %v1627, %v1623
    %v1960 = vpack.c.b16 %v1628, %v1624
    %v1961 = vpack.c.b16 %v1629, %v1625
    %v1962 = vpack.c.b16 %v1634, %v1630
    %v1963 = vpack.c.b16 %v1635, %v1631
    %v1964 = vpack.c.b16 %v1636, %v1632
    %v1965 = vpack.c.b16 %v1637, %v1633
    %v1966 = vpack.c.b16 %v1642, %v1638
    %v1967 = vpack.c.b16 %v1643, %v1639
    %v1968 = vpack.c.b16 %v1644, %v1640
    %v1969 = vpack.c.b16 %v1645, %v1641
    %v1970 = vpack.c.b16 %v1650, %v1646
    %v1971 = vpack.c.b16 %v1651, %v1647
    %v1972 = vpack.c.b16 %v1652, %v1648
    %v1973 = vpack.c.b16 %v1653, %v1649
    %v1974 = vpack.c.b16 %v1658, %v1654
    %v1975 = vpack.c.b16 %v1659, %v1655
    %v1976 = vpack.c.b16 %v1660, %v1656
    %v1977 = vpack.c.b16 %v1661, %v1657
    %v1978 = vpack.c.b16 %v1666, %v1662
    %v1979 = vpack.c.b16 %v1667, %v1663
    %v1980 = vpack.c.b16 %v1668, %v1664
    %v1981 = vpack.c.b16 %v1669, %v1665
    %v1982 = vpack.c.b16 %v1674, %v1670
    %v1983 = vpack.c.b16 %v1675, %v1671
    %v1984 = vpack.c.b16 %v1676, %v1672
    %v1985 = vpack.c.b16 %v1677, %v1673
    %v1986 = vpack.c.b16 %v1682, %v1678
    %v1987 = vpack.c.b16 %v1683, %v1679
    %v1988 = vpack.c.b16 %v1684, %v1680
    %v1989 = vpack.c.b16 %v1685, %v1681
    %v1990 = vpack.c.b16 %v1690, %v1686
    %v1991 = vpack.c.b16 %v1691, %v1687
    %v1992 = vpack.c.b16 %v1692, %v1688
    %v1993 = vpack.c.b16 %v1693, %v1689
    %v1994 = vpack.c.b16 %v1698, %v1694
    %v1995 = vpack.c.b16 %v1699, %v1695
    %v1996 = vpack.c.b16 %v1700, %v1696
    %v1997 = vpack.c.b16 %v1701, %v1697
    %v1998 = vpack.c.b16 %v1706, %v1702
    %v1999 = vpack.c.b16 %v1707, %v1703
    %v2000 = vpack.c.b16 %v1708, %v1704
    %v2001 = vpack.c.b16 %v1709, %v1705
    %v2002 = vpack.c.b16 %v1714, %v1710
    %v2003 = vpack.c.b16 %v1715, %v1711
    %v2004 = vpack.c.b16 %v1716, %v1712
    %v2005 = vpack.c.b16 %v1717, %v1713
    %v2006 = vpack.c.b16 %v1722, %v1718
    %v2007 = vpack.c.b16 %v1723, %v1719
    %v2008 = vpack.c.b16 %v1724, %v1720
    %v2009 = vpack.c.b16 %v1725, %v1721
    %v2010 = vpack.c.b16 %v1730, %v1726
    %v2011 = vpack.c.b16 %v1731, %v1727
    %v2012 = vpack.c.b16 %v1732, %v1728
    %v2013 = vpack.c.b16 %v1733, %v1729
    %v2014 = vpack.c.b16 %v1738, %v1734
    %v2015 = vpack.c.b16 %v1739, %v1735
    %v2016 = vpack.c.b16 %v1740, %v1736
    %v2017 = vpack.c.b16 %v1741, %v1737
    %v2018 = vpack.c.b16 %v1746, %v1742
    %v2019 = vpack.c.b16 %v1747, %v1743
    %v2020 = vpack.c.b16 %v1748, %v1744
    %v2021 = vpack.c.b16 %v1749, %v1745
    %v2022 = vpack.c.b16 %v1754, %v1750
    %v2023 = vpack.c.b16 %v1755, %v1751
    %v2024 = vpack.c.b16 %v1756, %v1752
    %v2025 = vpack.c.b16 %v1757, %v1753
    %v2026 = vpack.c.b16 %v1762, %v1758
    %v2027 = vpack.c.b16 %v1763, %v1759
    %v2028 = vpack.c.b16 %v1764, %v1760
    %v2029 = vpack.c.b16 %v1765, %v1761
    %v2030 = vpack.c.b16 %v1770, %v1766
    %v2031 = vpack.c.b16 %v1771, %v1767
    %v2032 = vpack.c.b16 %v1772, %v1768
    %v2033 = vpack.c.b16 %v1773, %v1769
    %v2034 = vpack.c.b16 %v1778, %v1774
    %v2035 = vpack.c.b16 %v1779, %v1775
    %v2036 = vpack.c.b16 %v1780, %v1776
    %v2037 = vpack.c.b16 %v1781, %v1777
    %2294 = vmatpush.bf16.msra.mxu0 %v1810
    %2295 = vmatpush.bf16.msra.mxu0 %v1806
    %2296 = vmatpush.bf16.msra.mxu0 %v1802
    %2297 = vmatpush.bf16.msra.mxu0 %v1798
    %2298 = vmatpush.bf16.msra.mxu0 %v1794
    %2299 = vmatpush.bf16.msra.mxu0 %v1790
    %2300 = vmatpush.bf16.msra.mxu0 %v1786
    %2301 = vmatpush.bf16.msra.mxu0 %v1782
    %2302 = vmatmul.bf16.gmra.mxu0 %v740
    %v2303 = vpop.f32.mrf.mxu0
    %v2304 = vadd.f32 %v1006, %v2303
    %v2305 = vpop.f32.mrf.mxu0
    %v2306 = vadd.f32 %v1006, %v2305
    %2307 = vdwg.mxu0
    %2308 = vmatpush.bf16.msra.mxu0 %v1842
    %2309 = vmatpush.bf16.msra.mxu0 %v1838
    %2310 = vmatpush.bf16.msra.mxu0 %v1834
    %2311 = vmatpush.bf16.msra.mxu0 %v1830
    %2312 = vmatpush.bf16.msra.mxu0 %v1826
    %2313 = vmatpush.bf16.msra.mxu0 %v1822
    %2314 = vmatpush.bf16.msra.mxu0 %v1818
    %2315 = vmatpush.bf16.msra.mxu0 %v1814
    %2316 = vmatmul.bf16.gmra.mxu0 %v741
    %v2317 = vpop.f32.mrf.mxu0
    %v2318 = vadd.f32 %v2304, %v2317
    %v2319 = vpop.f32.mrf.mxu0
    %v2320 = vadd.f32 %v2306, %v2319
    %2321 = vdwg.mxu0
    %2322 = vmatpush.bf16.msra.mxu0 %v1874
    %2323 = vmatpush.bf16.msra.mxu0 %v1870
    %2324 = vmatpush.bf16.msra.mxu0 %v1866
    %2325 = vmatpush.bf16.msra.mxu0 %v1862
    %2326 = vmatpush.bf16.msra.mxu0 %v1858
    %2327 = vmatpush.bf16.msra.mxu0 %v1854
    %2328 = vmatpush.bf16.msra.mxu0 %v1850
    %2329 = vmatpush.bf16.msra.mxu0 %v1846
    %2330 = vmatmul.bf16.gmra.mxu0 %v742
    %v2331 = vpop.f32.mrf.mxu0
    %v2332 = vadd.f32 %v2318, %v2331
    %v2333 = vpop.f32.mrf.mxu0
    %v2334 = vadd.f32 %v2320, %v2333
    %2335 = vdwg.mxu0
    %2336 = vmatpush.bf16.msra.mxu0 %v1906
    %2337 = vmatpush.bf16.msra.mxu0 %v1902
    %2338 = vmatpush.bf16.msra.mxu0 %v1898
    %2339 = vmatpush.bf16.msra.mxu0 %v1894
    %2340 = vmatpush.bf16.msra.mxu0 %v1890
    %2341 = vmatpush.bf16.msra.mxu0 %v1886
    %2342 = vmatpush.bf16.msra.mxu0 %v1882
    %2343 = vmatpush.bf16.msra.mxu0 %v1878
    %2344 = vmatmul.bf16.gmra.mxu0 %v743
    %v2345 = vpop.f32.mrf.mxu0
    %v2346 = vadd.f32 %v2332, %v2345
    %v2347 = vpop.f32.mrf.mxu0
    %v2348 = vadd.f32 %v2334, %v2347
    %2349 = vdwg.mxu0
    %2350 = vmatpush.bf16.msra.mxu0 %v1938
    %2351 = vmatpush.bf16.msra.mxu0 %v1934
    %2352 = vmatpush.bf16.msra.mxu0 %v1930
    %2353 = vmatpush.bf16.msra.mxu0 %v1926
    %2354 = vmatpush.bf16.msra.mxu0 %v1922
    %2355 = vmatpush.bf16.msra.mxu0 %v1918
    %2356 = vmatpush.bf16.msra.mxu0 %v1914
    %2357 = vmatpush.bf16.msra.mxu0 %v1910
    %2358 = vmatmul.bf16.gmra.mxu0 %v744
    %v2359 = vpop.f32.mrf.mxu0
    %v2360 = vadd.f32 %v2346, %v2359
    %v2361 = vpop.f32.mrf.mxu0
    %v2362 = vadd.f32 %v2348, %v2361
    %2363 = vdwg.mxu0
    %2364 = vmatpush.bf16.msra.mxu0 %v1970
    %2365 = vmatpush.bf16.msra.mxu0 %v1966
    %2366 = vmatpush.bf16.msra.mxu0 %v1962
    %2367 = vmatpush.bf16.msra.mxu0 %v1958
    %2368 = vmatpush.bf16.msra.mxu0 %v1954
    %2369 = vmatpush.bf16.msra.mxu0 %v1950
    %2370 = vmatpush.bf16.msra.mxu0 %v1946
    %2371 = vmatpush.bf16.msra.mxu0 %v1942
    %2372 = vmatmul.bf16.gmra.mxu0 %v745
    %v2373 = vpop.f32.mrf.mxu0
    %v2374 = vadd.f32 %v2360, %v2373
    %v2375 = vpop.f32.mrf.mxu0
    %v2376 = vadd.f32 %v2362, %v2375
    %2377 = vdwg.mxu0
    %2378 = vmatpush.bf16.msra.mxu0 %v2002
    %2379 = vmatpush.bf16.msra.mxu0 %v1998
    %2380 = vmatpush.bf16.msra.mxu0 %v1994
    %2381 = vmatpush.bf16.msra.mxu0 %v1990
    %2382 = vmatpush.bf16.msra.mxu0 %v1986
    %2383 = vmatpush.bf16.msra.mxu0 %v1982
    %2384 = vmatpush.bf16.msra.mxu0 %v1978
    %2385 = vmatpush.bf16.msra.mxu0 %v1974
    %2386 = vmatmul.bf16.gmra.mxu0 %v746
    %v2387 = vpop.f32.mrf.mxu0
    %v2388 = vadd.f32 %v2374, %v2387
    %v2389 = vpop.f32.mrf.mxu0
    %v2390 = vadd.f32 %v2376, %v2389
    %2391 = vdwg.mxu0
    %2392 = vmatpush.bf16.msra.mxu0 %v2034
    %2393 = vmatpush.bf16.msra.mxu0 %v2030
    %2394 = vmatpush.bf16.msra.mxu0 %v2026
    %2395 = vmatpush.bf16.msra.mxu0 %v2022
    %2396 = vmatpush.bf16.msra.mxu0 %v2018
    %2397 = vmatpush.bf16.msra.mxu0 %v2014
    %2398 = vmatpush.bf16.msra.mxu0 %v2010
    %2399 = vmatpush.bf16.msra.mxu0 %v2006
    %2400 = vmatmul.bf16.gmra.mxu0 %v747
    %v2401 = vpop.f32.mrf.mxu0
    %v2402 = vadd.f32 %v2388, %v2401
    %v2403 = vpop.f32.mrf.mxu0
    %v2404 = vadd.f32 %v2390, %v2403
    %2405 = vdwg.mxu0
    %2406 = vmatpush.bf16.msra.mxu0 %v1811
    %2407 = vmatpush.bf16.msra.mxu0 %v1807
    %2408 = vmatpush.bf16.msra.mxu0 %v1803
    %2409 = vmatpush.bf16.msra.mxu0 %v1799
    %2410 = vmatpush.bf16.msra.mxu0 %v1795
    %2411 = vmatpush.bf16.msra.mxu0 %v1791
    %2412 = vmatpush.bf16.msra.mxu0 %v1787
    %2413 = vmatpush.bf16.msra.mxu0 %v1783
    %2414 = vmatmul.bf16.gmra.mxu0 %v740
    %v2415 = vpop.f32.mrf.mxu0
    %v2416 = vadd.f32 %v1007, %v2415
    %v2417 = vpop.f32.mrf.mxu0
    %v2418 = vadd.f32 %v1007, %v2417
    %2419 = vdwg.mxu0
    %2420 = vmatpush.bf16.msra.mxu0 %v1843
    %2421 = vmatpush.bf16.msra.mxu0 %v1839
    %2422 = vmatpush.bf16.msra.mxu0 %v1835
    %2423 = vmatpush.bf16.msra.mxu0 %v1831
    %2424 = vmatpush.bf16.msra.mxu0 %v1827
    %2425 = vmatpush.bf16.msra.mxu0 %v1823
    %2426 = vmatpush.bf16.msra.mxu0 %v1819
    %2427 = vmatpush.bf16.msra.mxu0 %v1815
    %2428 = vmatmul.bf16.gmra.mxu0 %v741
    %v2429 = vpop.f32.mrf.mxu0
    %v2430 = vadd.f32 %v2416, %v2429
    %v2431 = vpop.f32.mrf.mxu0
    %v2432 = vadd.f32 %v2418, %v2431
    %2433 = vdwg.mxu0
    %2434 = vmatpush.bf16.msra.mxu0 %v1875
    %2435 = vmatpush.bf16.msra.mxu0 %v1871
    %2436 = vmatpush.bf16.msra.mxu0 %v1867
    %2437 = vmatpush.bf16.msra.mxu0 %v1863
    %2438 = vmatpush.bf16.msra.mxu0 %v1859
    %2439 = vmatpush.bf16.msra.mxu0 %v1855
    %2440 = vmatpush.bf16.msra.mxu0 %v1851
    %2441 = vmatpush.bf16.msra.mxu0 %v1847
    %2442 = vmatmul.bf16.gmra.mxu0 %v742
    %v2443 = vpop.f32.mrf.mxu0
    %v2444 = vadd.f32 %v2430, %v2443
    %v2445 = vpop.f32.mrf.mxu0
    %v2446 = vadd.f32 %v2432, %v2445
    %2447 = vdwg.mxu0
    %2448 = vmatpush.bf16.msra.mxu0 %v1907
    %2449 = vmatpush.bf16.msra.mxu0 %v1903
    %2450 = vmatpush.bf16.msra.mxu0 %v1899
    %2451 = vmatpush.bf16.msra.mxu0 %v1895
    %2452 = vmatpush.bf16.msra.mxu0 %v1891
    %2453 = vmatpush.bf16.msra.mxu0 %v1887
    %2454 = vmatpush.bf16.msra.mxu0 %v1883
    %2455 = vmatpush.bf16.msra.mxu0 %v1879
    %2456 = vmatmul.bf16.gmra.mxu0 %v743
    %v2457 = vpop.f32.mrf.mxu0
    %v2458 = vadd.f32 %v2444, %v2457
    %v2459 = vpop.f32.mrf.mxu0
    %v2460 = vadd.f32 %v2446, %v2459
    %2461 = vdwg.mxu0
    %2462 = vmatpush.bf16.msra.mxu0 %v1939
    %2463 = vmatpush.bf16.msra.mxu0 %v1935
    %2464 = vmatpush.bf16.msra.mxu0 %v1931
    %2465 = vmatpush.bf16.msra.mxu0 %v1927
    %2466 = vmatpush.bf16.msra.mxu0 %v1923
    %2467 = vmatpush.bf16.msra.mxu0 %v1919
    %2468 = vmatpush.bf16.msra.mxu0 %v1915
    %2469 = vmatpush.bf16.msra.mxu0 %v1911
    %2470 = vmatmul.bf16.gmra.mxu0 %v744
    %v2471 = vpop.f32.mrf.mxu0
    %v2472 = vadd.f32 %v2458, %v2471
    %v2473 = vpop.f32.mrf.mxu0
    %v2474 = vadd.f32 %v2460, %v2473
    %2475 = vdwg.mxu0
    %2476 = vmatpush.bf16.msra.mxu0 %v1971
    %2477 = vmatpush.bf16.msra.mxu0 %v1967
    %2478 = vmatpush.bf16.msra.mxu0 %v1963
    %2479 = vmatpush.bf16.msra.mxu0 %v1959
    %2480 = vmatpush.bf16.msra.mxu0 %v1955
    %2481 = vmatpush.bf16.msra.mxu0 %v1951
    %2482 = vmatpush.bf16.msra.mxu0 %v1947
    %2483 = vmatpush.bf16.msra.mxu0 %v1943
    %2484 = vmatmul.bf16.gmra.mxu0 %v745
    %v2485 = vpop.f32.mrf.mxu0
    %v2486 = vadd.f32 %v2472, %v2485
    %v2487 = vpop.f32.mrf.mxu0
    %v2488 = vadd.f32 %v2474, %v2487
    %2489 = vdwg.mxu0
    %2490 = vmatpush.bf16.msra.mxu0 %v2003
    %2491 = vmatpush.bf16.msra.mxu0 %v1999
    %2492 = vmatpush.bf16.msra.mxu0 %v1995
    %2493 = vmatpush.bf16.msra.mxu0 %v1991
    %2494 = vmatpush.bf16.msra.mxu0 %v1987
    %2495 = vmatpush.bf16.msra.mxu0 %v1983
    %2496 = vmatpush.bf16.msra.mxu0 %v1979
    %2497 = vmatpush.bf16.msra.mxu0 %v1975
    %2498 = vmatmul.bf16.gmra.mxu0 %v746
    %v2499 = vpop.f32.mrf.mxu0
    %v2500 = vadd.f32 %v2486, %v2499
    %v2501 = vpop.f32.mrf.mxu0
    %v2502 = vadd.f32 %v2488, %v2501
    %2503 = vdwg.mxu0
    %2504 = vmatpush.bf16.msra.mxu0 %v2035
    %2505 = vmatpush.bf16.msra.mxu0 %v2031
    %2506 = vmatpush.bf16.msra.mxu0 %v2027
    %2507 = vmatpush.bf16.msra.mxu0 %v2023
    %2508 = vmatpush.bf16.msra.mxu0 %v2019
    %2509 = vmatpush.bf16.msra.mxu0 %v2015
    %2510 = vmatpush.bf16.msra.mxu0 %v2011
    %2511 = vmatpush.bf16.msra.mxu0 %v2007
    %2512 = vmatmul.bf16.gmra.mxu0 %v747
    %v2513 = vpop.f32.mrf.mxu0
    %v2514 = vadd.f32 %v2500, %v2513
    %v2515 = vpop.f32.mrf.mxu0
    %v2516 = vadd.f32 %v2502, %v2515
    %2517 = vdwg.mxu0
    %2518 = vmatpush.bf16.msra.mxu0 %v1812
    %2519 = vmatpush.bf16.msra.mxu0 %v1808
    %2520 = vmatpush.bf16.msra.mxu0 %v1804
    %2521 = vmatpush.bf16.msra.mxu0 %v1800
    %2522 = vmatpush.bf16.msra.mxu0 %v1796
    %2523 = vmatpush.bf16.msra.mxu0 %v1792
    %2524 = vmatpush.bf16.msra.mxu0 %v1788
    %2525 = vmatpush.bf16.msra.mxu0 %v1784
    %2526 = vmatmul.bf16.gmra.mxu0 %v740
    %v2527 = vpop.f32.mrf.mxu0
    %v2528 = vadd.f32 %v1008, %v2527
    %v2529 = vpop.f32.mrf.mxu0
    %v2530 = vadd.f32 %v1008, %v2529
    %2531 = vdwg.mxu0
    %2532 = vmatpush.bf16.msra.mxu0 %v1844
    %2533 = vmatpush.bf16.msra.mxu0 %v1840
    %2534 = vmatpush.bf16.msra.mxu0 %v1836
    %2535 = vmatpush.bf16.msra.mxu0 %v1832
    %2536 = vmatpush.bf16.msra.mxu0 %v1828
    %2537 = vmatpush.bf16.msra.mxu0 %v1824
    %2538 = vmatpush.bf16.msra.mxu0 %v1820
    %2539 = vmatpush.bf16.msra.mxu0 %v1816
    %2540 = vmatmul.bf16.gmra.mxu0 %v741
    %v2541 = vpop.f32.mrf.mxu0
    %v2542 = vadd.f32 %v2528, %v2541
    %v2543 = vpop.f32.mrf.mxu0
    %v2544 = vadd.f32 %v2530, %v2543
    %2545 = vdwg.mxu0
    %2546 = vmatpush.bf16.msra.mxu0 %v1876
    %2547 = vmatpush.bf16.msra.mxu0 %v1872
    %2548 = vmatpush.bf16.msra.mxu0 %v1868
    %2549 = vmatpush.bf16.msra.mxu0 %v1864
    %2550 = vmatpush.bf16.msra.mxu0 %v1860
    %2551 = vmatpush.bf16.msra.mxu0 %v1856
    %2552 = vmatpush.bf16.msra.mxu0 %v1852
    %2553 = vmatpush.bf16.msra.mxu0 %v1848
    %2554 = vmatmul.bf16.gmra.mxu0 %v742
    %v2555 = vpop.f32.mrf.mxu0
    %v2556 = vadd.f32 %v2542, %v2555
    %v2557 = vpop.f32.mrf.mxu0
    %v2558 = vadd.f32 %v2544, %v2557
    %2559 = vdwg.mxu0
    %2560 = vmatpush.bf16.msra.mxu0 %v1908
    %2561 = vmatpush.bf16.msra.mxu0 %v1904
    %2562 = vmatpush.bf16.msra.mxu0 %v1900
    %2563 = vmatpush.bf16.msra.mxu0 %v1896
    %2564 = vmatpush.bf16.msra.mxu0 %v1892
    %2565 = vmatpush.bf16.msra.mxu0 %v1888
    %2566 = vmatpush.bf16.msra.mxu0 %v1884
    %2567 = vmatpush.bf16.msra.mxu0 %v1880
    %2568 = vmatmul.bf16.gmra.mxu0 %v743
    %v2569 = vpop.f32.mrf.mxu0
    %v2570 = vadd.f32 %v2556, %v2569
    %v2571 = vpop.f32.mrf.mxu0
    %v2572 = vadd.f32 %v2558, %v2571
    %2573 = vdwg.mxu0
    %2574 = vmatpush.bf16.msra.mxu0 %v1940
    %2575 = vmatpush.bf16.msra.mxu0 %v1936
    %2576 = vmatpush.bf16.msra.mxu0 %v1932
    %2577 = vmatpush.bf16.msra.mxu0 %v1928
    %2578 = vmatpush.bf16.msra.mxu0 %v1924
    %2579 = vmatpush.bf16.msra.mxu0 %v1920
    %2580 = vmatpush.bf16.msra.mxu0 %v1916
    %2581 = vmatpush.bf16.msra.mxu0 %v1912
    %2582 = vmatmul.bf16.gmra.mxu0 %v744
    %v2583 = vpop.f32.mrf.mxu0
    %v2584 = vadd.f32 %v2570, %v2583
    %v2585 = vpop.f32.mrf.mxu0
    %v2586 = vadd.f32 %v2572, %v2585
    %2587 = vdwg.mxu0
    %2588 = vmatpush.bf16.msra.mxu0 %v1972
    %2589 = vmatpush.bf16.msra.mxu0 %v1968
    %2590 = vmatpush.bf16.msra.mxu0 %v1964
    %2591 = vmatpush.bf16.msra.mxu0 %v1960
    %2592 = vmatpush.bf16.msra.mxu0 %v1956
    %2593 = vmatpush.bf16.msra.mxu0 %v1952
    %2594 = vmatpush.bf16.msra.mxu0 %v1948
    %2595 = vmatpush.bf16.msra.mxu0 %v1944
    %2596 = vmatmul.bf16.gmra.mxu0 %v745
    %v2597 = vpop.f32.mrf.mxu0
    %v2598 = vadd.f32 %v2584, %v2597
    %v2599 = vpop.f32.mrf.mxu0
    %v2600 = vadd.f32 %v2586, %v2599
    %2601 = vdwg.mxu0
    %2602 = vmatpush.bf16.msra.mxu0 %v2004
    %2603 = vmatpush.bf16.msra.mxu0 %v2000
    %2604 = vmatpush.bf16.msra.mxu0 %v1996
    %2605 = vmatpush.bf16.msra.mxu0 %v1992
    %2606 = vmatpush.bf16.msra.mxu0 %v1988
    %2607 = vmatpush.bf16.msra.mxu0 %v1984
    %2608 = vmatpush.bf16.msra.mxu0 %v1980
    %2609 = vmatpush.bf16.msra.mxu0 %v1976
    %2610 = vmatmul.bf16.gmra.mxu0 %v746
    %v2611 = vpop.f32.mrf.mxu0
    %v2612 = vadd.f32 %v2598, %v2611
    %v2613 = vpop.f32.mrf.mxu0
    %v2614 = vadd.f32 %v2600, %v2613
    %2615 = vdwg.mxu0
    %2616 = vmatpush.bf16.msra.mxu0 %v2036
    %2617 = vmatpush.bf16.msra.mxu0 %v2032
    %2618 = vmatpush.bf16.msra.mxu0 %v2028
    %2619 = vmatpush.bf16.msra.mxu0 %v2024
    %2620 = vmatpush.bf16.msra.mxu0 %v2020
    %2621 = vmatpush.bf16.msra.mxu0 %v2016
    %2622 = vmatpush.bf16.msra.mxu0 %v2012
    %2623 = vmatpush.bf16.msra.mxu0 %v2008
    %2624 = vmatmul.bf16.gmra.mxu0 %v747
    %v2625 = vpop.f32.mrf.mxu0
    %v2626 = vadd.f32 %v2612, %v2625
    %v2627 = vpop.f32.mrf.mxu0
    %v2628 = vadd.f32 %v2614, %v2627
    %2629 = vdwg.mxu0
    %2630 = vmatpush.bf16.msra.mxu0 %v1813
    %2631 = vmatpush.bf16.msra.mxu0 %v1809
    %2632 = vmatpush.bf16.msra.mxu0 %v1805
    %2633 = vmatpush.bf16.msra.mxu0 %v1801
    %2634 = vmatpush.bf16.msra.mxu0 %v1797
    %2635 = vmatpush.bf16.msra.mxu0 %v1793
    %2636 = vmatpush.bf16.msra.mxu0 %v1789
    %2637 = vmatpush.bf16.msra.mxu0 %v1785
    %2638 = vmatmul.bf16.gmra.mxu0 %v740
    %v2639 = vpop.f32.mrf.mxu0
    %v2640 = vadd.f32 %v1009, %v2639
    %v2641 = vpop.f32.mrf.mxu0
    %v2642 = vadd.f32 %v1009, %v2641
    %2643 = vdwg.mxu0
    %2644 = vmatpush.bf16.msra.mxu0 %v1845
    %2645 = vmatpush.bf16.msra.mxu0 %v1841
    %2646 = vmatpush.bf16.msra.mxu0 %v1837
    %2647 = vmatpush.bf16.msra.mxu0 %v1833
    %2648 = vmatpush.bf16.msra.mxu0 %v1829
    %2649 = vmatpush.bf16.msra.mxu0 %v1825
    %2650 = vmatpush.bf16.msra.mxu0 %v1821
    %2651 = vmatpush.bf16.msra.mxu0 %v1817
    %2652 = vmatmul.bf16.gmra.mxu0 %v741
    %v2653 = vpop.f32.mrf.mxu0
    %v2654 = vadd.f32 %v2640, %v2653
    %v2655 = vpop.f32.mrf.mxu0
    %v2656 = vadd.f32 %v2642, %v2655
    %2657 = vdwg.mxu0
    %2658 = vmatpush.bf16.msra.mxu0 %v1877
    %2659 = vmatpush.bf16.msra.mxu0 %v1873
    %2660 = vmatpush.bf16.msra.mxu0 %v1869
    %2661 = vmatpush.bf16.msra.mxu0 %v1865
    %2662 = vmatpush.bf16.msra.mxu0 %v1861
    %2663 = vmatpush.bf16.msra.mxu0 %v1857
    %2664 = vmatpush.bf16.msra.mxu0 %v1853
    %2665 = vmatpush.bf16.msra.mxu0 %v1849
    %2666 = vmatmul.bf16.gmra.mxu0 %v742
    %v2667 = vpop.f32.mrf.mxu0
    %v2668 = vadd.f32 %v2654, %v2667
    %v2669 = vpop.f32.mrf.mxu0
    %v2670 = vadd.f32 %v2656, %v2669
    %2671 = vdwg.mxu0
    %2672 = vmatpush.bf16.msra.mxu0 %v1909
    %2673 = vmatpush.bf16.msra.mxu0 %v1905
    %2674 = vmatpush.bf16.msra.mxu0 %v1901
    %2675 = vmatpush.bf16.msra.mxu0 %v1897
    %2676 = vmatpush.bf16.msra.mxu0 %v1893
    %2677 = vmatpush.bf16.msra.mxu0 %v1889
    %2678 = vmatpush.bf16.msra.mxu0 %v1885
    %2679 = vmatpush.bf16.msra.mxu0 %v1881
    %2680 = vmatmul.bf16.gmra.mxu0 %v743
    %v2681 = vpop.f32.mrf.mxu0
    %v2682 = vadd.f32 %v2668, %v2681
    %v2683 = vpop.f32.mrf.mxu0
    %v2684 = vadd.f32 %v2670, %v2683
    %2685 = vdwg.mxu0
    %2686 = vmatpush.bf16.msra.mxu0 %v1941
    %2687 = vmatpush.bf16.msra.mxu0 %v1937
    %2688 = vmatpush.bf16.msra.mxu0 %v1933
    %2689 = vmatpush.bf16.msra.mxu0 %v1929
    %2690 = vmatpush.bf16.msra.mxu0 %v1925
    %2691 = vmatpush.bf16.msra.mxu0 %v1921
    %2692 = vmatpush.bf16.msra.mxu0 %v1917
    %2693 = vmatpush.bf16.msra.mxu0 %v1913
    %2694 = vmatmul.bf16.gmra.mxu0 %v744
    %v2695 = vpop.f32.mrf.mxu0
    %v2696 = vadd.f32 %v2682, %v2695
    %v2697 = vpop.f32.mrf.mxu0
    %v2698 = vadd.f32 %v2684, %v2697
    %2699 = vdwg.mxu0
    %2700 = vmatpush.bf16.msra.mxu0 %v1973
    %2701 = vmatpush.bf16.msra.mxu0 %v1969
    %2702 = vmatpush.bf16.msra.mxu0 %v1965
    %2703 = vmatpush.bf16.msra.mxu0 %v1961
    %2704 = vmatpush.bf16.msra.mxu0 %v1957
    %2705 = vmatpush.bf16.msra.mxu0 %v1953
    %2706 = vmatpush.bf16.msra.mxu0 %v1949
    %2707 = vmatpush.bf16.msra.mxu0 %v1945
    %2708 = vmatmul.bf16.gmra.mxu0 %v745
    %v2709 = vpop.f32.mrf.mxu0
    %v2710 = vadd.f32 %v2696, %v2709
    %v2711 = vpop.f32.mrf.mxu0
    %v2712 = vadd.f32 %v2698, %v2711
    %2713 = vdwg.mxu0
    %2714 = vmatpush.bf16.msra.mxu0 %v2005
    %2715 = vmatpush.bf16.msra.mxu0 %v2001
    %2716 = vmatpush.bf16.msra.mxu0 %v1997
    %2717 = vmatpush.bf16.msra.mxu0 %v1993
    %2718 = vmatpush.bf16.msra.mxu0 %v1989
    %2719 = vmatpush.bf16.msra.mxu0 %v1985
    %2720 = vmatpush.bf16.msra.mxu0 %v1981
    %2721 = vmatpush.bf16.msra.mxu0 %v1977
    %2722 = vmatmul.bf16.gmra.mxu0 %v746
    %v2723 = vpop.f32.mrf.mxu0
    %v2724 = vadd.f32 %v2710, %v2723
    %v2725 = vpop.f32.mrf.mxu0
    %v2726 = vadd.f32 %v2712, %v2725
    %2727 = vdwg.mxu0
    %2728 = vmatpush.bf16.msra.mxu0 %v2037
    %2729 = vmatpush.bf16.msra.mxu0 %v2033
    %2730 = vmatpush.bf16.msra.mxu0 %v2029
    %2731 = vmatpush.bf16.msra.mxu0 %v2025
    %2732 = vmatpush.bf16.msra.mxu0 %v2021
    %2733 = vmatpush.bf16.msra.mxu0 %v2017
    %2734 = vmatpush.bf16.msra.mxu0 %v2013
    %2735 = vmatpush.bf16.msra.mxu0 %v2009
    %2736 = vmatmul.bf16.gmra.mxu0 %v747
    %v2737 = vpop.f32.mrf.mxu0
    %v2738 = vadd.f32 %v2724, %v2737
    %v2739 = vpop.f32.mrf.mxu0
    %v2740 = vadd.f32 %v2726, %v2739
    %2741 = vdwg.mxu0
    %v2742 = vpack.c.bf16 %v2514, %v2402
    %v2743 = vpack.c.bf16 %v2738, %v2626
    %v2744 = vpack.c.bf16 %v2516, %v2404
    %v2745 = vpack.c.bf16 %v2740, %v2628
    %v2746 = vunpack.c.l.bf16 %v2742
    %v2747 = vunpack.c.h.bf16 %v2742
    %v2748 = vunpack.c.l.bf16 %v2743
    %v2749 = vunpack.c.h.bf16 %v2743
    %v2750 = vunpack.c.l.bf16 %v2744
    %v2751 = vunpack.c.h.bf16 %v2744
    %v2752 = vunpack.c.l.bf16 %v2745
    %v2753 = vunpack.c.h.bf16 %v2745
    %v2754 = vmul.f32 %v2746, 0.100097656
    %v2755 = vmul.f32 %v2747, 0.100097656
    %v2756 = vmul.f32 %v2748, 0.100097656
    %v2757 = vmul.f32 %v2749, 0.100097656
    %v2758 = vmul.f32 %v2750, 0.100097656
    %v2759 = vmul.f32 %v2751, 0.100097656
    %v2760 = vmul.f32 %v2752, 0.100097656
    %v2761 = vmul.f32 %v2753, 0.100097656
    %v2762 = vpack.c.bf16 %v2755, %v2754
    %v2763 = vpack.c.bf16 %v2757, %v2756
    %v2764 = vpack.c.bf16 %v2759, %v2758
    %v2765 = vpack.c.bf16 %v2761, %v2760
    %v2766 = vunpack.c.l.bf16 %v2762
    %v2767 = vunpack.c.h.bf16 %v2762
    %v2768 = vunpack.c.l.bf16 %v2763
    %v2769 = vunpack.c.h.bf16 %v2763
    %v2770 = vunpack.c.l.bf16 %v2764
    %v2771 = vunpack.c.h.bf16 %v2764
    %v2772 = vunpack.c.l.bf16 %v2765
    %v2773 = vunpack.c.h.bf16 %v2765
    %v2774 = vmax.f32 %v2746, %v2766
    %v2775 = vmax.f32 %v2747, %v2767
    %v2776 = vmax.f32 %v2748, %v2768
    %v2777 = vmax.f32 %v2749, %v2769
    %v2778 = vmax.f32 %v2750, %v2770
    %v2779 = vmax.f32 %v2751, %v2771
    %v2780 = vmax.f32 %v2752, %v2772
    %v2781 = vmax.f32 %v2753, %v2773
    %v2782 = vpack.c.bf16 %v2778, %v2774
    %v2783 = vpack.c.bf16 %v2779, %v2775
    %v2784 = vpack.c.bf16 %v2780, %v2776
    %v2785 = vpack.c.bf16 %v2781, %v2777
    %v2786 = vld [vmem:[#allocation11] sm:$0xf]
    %v2787 = vld [vmem:[#allocation11 + $0x4] sm:$0xf]
    %v2788 = vld [vmem:[#allocation11 + $0x8] sm:$0xf]
    %v2789 = vld [vmem:[#allocation11 + $0xc] sm:$0xf]
    %v2790 = vld [vmem:[#allocation11 + $0x10] sm:$0xf]
    %v2791 = vld [vmem:[#allocation11 + $0x14] sm:$0xf]
    %v2792 = vld [vmem:[#allocation11 + $0x18] sm:$0xf]
    %v2793 = vld [vmem:[#allocation11 + $0x1c] sm:$0xf]
    %v2794 = vld [vmem:[#allocation11 + $0x20] sm:$0xf]
    %v2795 = vld [vmem:[#allocation11 + $0x24] sm:$0xf]
    %v2796 = vld [vmem:[#allocation11 + $0x28] sm:$0xf]
    %v2797 = vld [vmem:[#allocation11 + $0x2c] sm:$0xf]
    %v2798 = vld [vmem:[#allocation11 + $0x30] sm:$0xf]
    %v2799 = vld [vmem:[#allocation11 + $0x34] sm:$0xf]
    %v2800 = vld [vmem:[#allocation11 + $0x38] sm:$0xf]
    %v2801 = vld [vmem:[#allocation11 + $0x3c] sm:$0xf]
    %v2802 = vld [vmem:[#allocation11 + $0x40] sm:$0xf]
    %v2803 = vld [vmem:[#allocation11 + $0x44] sm:$0xf]
    %v2804 = vld [vmem:[#allocation11 + $0x48] sm:$0xf]
    %v2805 = vld [vmem:[#allocation11 + $0x4c] sm:$0xf]
    %v2806 = vld [vmem:[#allocation11 + $0x50] sm:$0xf]
    %v2807 = vld [vmem:[#allocation11 + $0x54] sm:$0xf]
    %v2808 = vld [vmem:[#allocation11 + $0x58] sm:$0xf]
    %v2809 = vld [vmem:[#allocation11 + $0x5c] sm:$0xf]
    %v2810 = vld [vmem:[#allocation11 + $0x60] sm:$0xf]
    %v2811 = vld [vmem:[#allocation11 + $0x64] sm:$0xf]
    %v2812 = vld [vmem:[#allocation11 + $0x68] sm:$0xf]
    %v2813 = vld [vmem:[#allocation11 + $0x6c] sm:$0xf]
    %v2814 = vld [vmem:[#allocation11 + $0x70] sm:$0xf]
    %v2815 = vld [vmem:[#allocation11 + $0x74] sm:$0xf]
    %v2816 = vld [vmem:[#allocation11 + $0x78] sm:$0xf]
    %v2817 = vld [vmem:[#allocation11 + $0x7c] sm:$0xf]
    %v2818 = vld [vmem:[#allocation11 + $0x80] sm:$0xf]
    %v2819 = vld [vmem:[#allocation11 + $0x84] sm:$0xf]
    %v2820 = vld [vmem:[#allocation11 + $0x88] sm:$0xf]
    %v2821 = vld [vmem:[#allocation11 + $0x8c] sm:$0xf]
    %v2822 = vld [vmem:[#allocation11 + $0x90] sm:$0xf]
    %v2823 = vld [vmem:[#allocation11 + $0x94] sm:$0xf]
    %v2824 = vld [vmem:[#allocation11 + $0x98] sm:$0xf]
    %v2825 = vld [vmem:[#allocation11 + $0x9c] sm:$0xf]
    %v2826 = vld [vmem:[#allocation11 + $0xa0] sm:$0xf]
    %v2827 = vld [vmem:[#allocation11 + $0xa4] sm:$0xf]
    %v2828 = vld [vmem:[#allocation11 + $0xa8] sm:$0xf]
    %v2829 = vld [vmem:[#allocation11 + $0xac] sm:$0xf]
    %v2830 = vld [vmem:[#allocation11 + $0xb0] sm:$0xf]
    %v2831 = vld [vmem:[#allocation11 + $0xb4] sm:$0xf]
    %v2832 = vld [vmem:[#allocation11 + $0xb8] sm:$0xf]
    %v2833 = vld [vmem:[#allocation11 + $0xbc] sm:$0xf]
    %v2834 = vld [vmem:[#allocation11 + $0xc0] sm:$0xf]
    %v2835 = vld [vmem:[#allocation11 + $0xc4] sm:$0xf]
    %v2836 = vld [vmem:[#allocation11 + $0xc8] sm:$0xf]
    %v2837 = vld [vmem:[#allocation11 + $0xcc] sm:$0xf]
    %v2838 = vld [vmem:[#allocation11 + $0xd0] sm:$0xf]
    %v2839 = vld [vmem:[#allocation11 + $0xd4] sm:$0xf]
    %v2840 = vld [vmem:[#allocation11 + $0xd8] sm:$0xf]
    %v2841 = vld [vmem:[#allocation11 + $0xdc] sm:$0xf]
    %v2842 = vld [vmem:[#allocation11 + $0xe0] sm:$0xf]
    %v2843 = vld [vmem:[#allocation11 + $0xe4] sm:$0xf]
    %v2844 = vld [vmem:[#allocation11 + $0xe8] sm:$0xf]
    %v2845 = vld [vmem:[#allocation11 + $0xec] sm:$0xf]
    %v2846 = vld [vmem:[#allocation11 + $0xf0] sm:$0xf]
    %v2847 = vld [vmem:[#allocation11 + $0xf4] sm:$0xf]
    %v2848 = vld [vmem:[#allocation11 + $0xf8] sm:$0xf]
    %v2849 = vld [vmem:[#allocation11 + $0xfc] sm:$0xf]
    %v2850 = vld [vmem:[%s6] sm:$0x1]
    %v2852 = vperm.slane %v2850, 0
    %v2918 = vunpack.c.l.b16 %v2786
    %v2919 = vunpack.c.l.b16 %v2787
    %v2920 = vunpack.c.l.b16 %v2788
    %v2921 = vunpack.c.l.b16 %v2789
    %v2922 = vunpack.c.l.b16 %v2790
    %v2923 = vunpack.c.l.b16 %v2791
    %v2924 = vunpack.c.l.b16 %v2792
    %v2925 = vunpack.c.l.b16 %v2793
    %v2926 = vunpack.c.l.b16 %v2794
    %v2927 = vunpack.c.l.b16 %v2795
    %v2928 = vunpack.c.l.b16 %v2796
    %v2929 = vunpack.c.l.b16 %v2797
    %v2930 = vunpack.c.l.b16 %v2798
    %v2931 = vunpack.c.l.b16 %v2799
    %v2932 = vunpack.c.l.b16 %v2800
    %v2933 = vunpack.c.l.b16 %v2801
    %v2934 = vunpack.c.l.b16 %v2802
    %v2935 = vunpack.c.l.b16 %v2803
    %v2936 = vunpack.c.l.b16 %v2804
    %v2937 = vunpack.c.l.b16 %v2805
    %v2938 = vunpack.c.l.b16 %v2806
    %v2939 = vunpack.c.l.b16 %v2807
    %v2940 = vunpack.c.l.b16 %v2808
    %v2941 = vunpack.c.l.b16 %v2809
    %v2942 = vunpack.c.l.b16 %v2810
    %v2943 = vunpack.c.l.b16 %v2811
    %v2944 = vunpack.c.l.b16 %v2812
    %v2945 = vunpack.c.l.b16 %v2813
    %v2946 = vunpack.c.l.b16 %v2814
    %v2947 = vunpack.c.l.b16 %v2815
    %v2948 = vunpack.c.l.b16 %v2816
    %v2949 = vunpack.c.l.b16 %v2817
    %v2950 = vunpack.c.l.b16 %v2818
    %v2951 = vunpack.c.l.b16 %v2819
    %v2952 = vunpack.c.l.b16 %v2820
    %v2953 = vunpack.c.l.b16 %v2821
    %v2954 = vunpack.c.l.b16 %v2822
    %v2955 = vunpack.c.l.b16 %v2823
    %v2956 = vunpack.c.l.b16 %v2824
    %v2957 = vunpack.c.l.b16 %v2825
    %v2958 = vunpack.c.l.b16 %v2826
    %v2959 = vunpack.c.l.b16 %v2827
    %v2960 = vunpack.c.l.b16 %v2828
    %v2961 = vunpack.c.l.b16 %v2829
    %v2962 = vunpack.c.l.b16 %v2830
    %v2963 = vunpack.c.l.b16 %v2831
    %v2964 = vunpack.c.l.b16 %v2832
    %v2965 = vunpack.c.l.b16 %v2833
    %v2966 = vunpack.c.l.b16 %v2834
    %v2967 = vunpack.c.l.b16 %v2835
    %v2968 = vunpack.c.l.b16 %v2836
    %v2969 = vunpack.c.l.b16 %v2837
    %v2970 = vunpack.c.l.b16 %v2838
    %v2971 = vunpack.c.l.b16 %v2839
    %v2972 = vunpack.c.l.b16 %v2840
    %v2973 = vunpack.c.l.b16 %v2841
    %v2974 = vunpack.c.l.b16 %v2842
    %v2975 = vunpack.c.l.b16 %v2843
    %v2976 = vunpack.c.l.b16 %v2844
    %v2977 = vunpack.c.l.b16 %v2845
    %v2978 = vunpack.c.l.b16 %v2846
    %v2979 = vunpack.c.l.b16 %v2847
    %v2980 = vunpack.c.l.b16 %v2848
    %v2981 = vunpack.c.l.b16 %v2849
    %v2982 = vpack.c.b16 %v2919, %v2918
    %v2983 = vpack.c.b16 %v2921, %v2920
    %v2984 = vpack.c.b16 %v2923, %v2922
    %v2985 = vpack.c.b16 %v2925, %v2924
    %v2986 = vpack.c.b16 %v2927, %v2926
    %v2987 = vpack.c.b16 %v2929, %v2928
    %v2988 = vpack.c.b16 %v2931, %v2930
    %v2989 = vpack.c.b16 %v2933, %v2932
    %v2990 = vpack.c.b16 %v2935, %v2934
    %v2991 = vpack.c.b16 %v2937, %v2936
    %v2992 = vpack.c.b16 %v2939, %v2938
    %v2993 = vpack.c.b16 %v2941, %v2940
    %v2994 = vpack.c.b16 %v2943, %v2942
    %v2995 = vpack.c.b16 %v2945, %v2944
    %v2996 = vpack.c.b16 %v2947, %v2946
    %v2997 = vpack.c.b16 %v2949, %v2948
    %v2998 = vpack.c.b16 %v2951, %v2950
    %v2999 = vpack.c.b16 %v2953, %v2952
    %v3000 = vpack.c.b16 %v2955, %v2954
    %v3001 = vpack.c.b16 %v2957, %v2956
    %v3002 = vpack.c.b16 %v2959, %v2958
    %v3003 = vpack.c.b16 %v2961, %v2960
    %v3004 = vpack.c.b16 %v2963, %v2962
    %v3005 = vpack.c.b16 %v2965, %v2964
    %v3006 = vpack.c.b16 %v2967, %v2966
    %v3007 = vpack.c.b16 %v2969, %v2968
    %v3008 = vpack.c.b16 %v2971, %v2970
    %v3009 = vpack.c.b16 %v2973, %v2972
    %v3010 = vpack.c.b16 %v2975, %v2974
    %v3011 = vpack.c.b16 %v2977, %v2976
    %v3012 = vpack.c.b16 %v2979, %v2978
    %v3013 = vpack.c.b16 %v2981, %v2980
    %3046 = vmatpush.bf16.msra.mxu0 %v2989
    %3047 = vmatpush.bf16.msra.mxu0 %v2988
    %3048 = vmatpush.bf16.msra.mxu0 %v2987
    %3049 = vmatpush.bf16.msra.mxu0 %v2986
    %3050 = vmatpush.bf16.msra.mxu0 %v2985
    %3051 = vmatpush.bf16.msra.mxu0 %v2984
    %3052 = vmatpush.bf16.msra.mxu0 %v2983
    %3053 = vmatpush.bf16.msra.mxu0 %v2982
    %3054 = vmatmul.bf16.gmra.mxu0 %v2782
    %v3055 = vpop.f32.mrf.mxu0
    %v3056 = vadd.f32 %v2852, %v3055
    %v3057 = vpop.f32.mrf.mxu0
    %v3058 = vadd.f32 %v2852, %v3057
    %3059 = vdwg.mxu0
    %3060 = vmatpush.bf16.msra.mxu0 %v2997
    %3061 = vmatpush.bf16.msra.mxu0 %v2996
    %3062 = vmatpush.bf16.msra.mxu0 %v2995
    %3063 = vmatpush.bf16.msra.mxu0 %v2994
    %3064 = vmatpush.bf16.msra.mxu0 %v2993
    %3065 = vmatpush.bf16.msra.mxu0 %v2992
    %3066 = vmatpush.bf16.msra.mxu0 %v2991
    %3067 = vmatpush.bf16.msra.mxu0 %v2990
    %3068 = vmatmul.bf16.gmra.mxu0 %v2783
    %v3069 = vpop.f32.mrf.mxu0
    %v3070 = vadd.f32 %v3056, %v3069
    %v3071 = vpop.f32.mrf.mxu0
    %v3072 = vadd.f32 %v3058, %v3071
    %3073 = vdwg.mxu0
    %3074 = vmatpush.bf16.msra.mxu0 %v3005
    %3075 = vmatpush.bf16.msra.mxu0 %v3004
    %3076 = vmatpush.bf16.msra.mxu0 %v3003
    %3077 = vmatpush.bf16.msra.mxu0 %v3002
    %3078 = vmatpush.bf16.msra.mxu0 %v3001
    %3079 = vmatpush.bf16.msra.mxu0 %v3000
    %3080 = vmatpush.bf16.msra.mxu0 %v2999
    %3081 = vmatpush.bf16.msra.mxu0 %v2998
    %3082 = vmatmul.bf16.gmra.mxu0 %v2784
    %v3083 = vpop.f32.mrf.mxu0
    %v3084 = vadd.f32 %v3070, %v3083
    %v3085 = vpop.f32.mrf.mxu0
    %v3086 = vadd.f32 %v3072, %v3085
    %3087 = vdwg.mxu0
    %3088 = vmatpush.bf16.msra.mxu0 %v3013
    %3089 = vmatpush.bf16.msra.mxu0 %v3012
    %3090 = vmatpush.bf16.msra.mxu0 %v3011
    %3091 = vmatpush.bf16.msra.mxu0 %v3010
    %3092 = vmatpush.bf16.msra.mxu0 %v3009
    %3093 = vmatpush.bf16.msra.mxu0 %v3008
    %3094 = vmatpush.bf16.msra.mxu0 %v3007
    %3095 = vmatpush.bf16.msra.mxu0 %v3006
    %3096 = vmatmul.bf16.gmra.mxu0 %v2785
    %v3097 = vpop.f32.mrf.mxu0
    %v3098 = vadd.f32 %v3084, %v3097
    %v3099 = vpop.f32.mrf.mxu0
    %v3100 = vadd.f32 %v3086, %v3099
    %3101 = vdwg.mxu0
    %v3102 = vpack.c.bf16 %v3098, %v3098
    %v3103 = vpack.c.bf16 %v3100, %v3100
    %v3104 = vunpack.c.l.bf16 %v3102
    %v3105 = vunpack.c.l.bf16 %v3103
    %v3106 = vmul.f32 %v3104, 0.100097656
    %v3107 = vmul.f32 %v3105, 0.100097656
    %v3108 = vpack.c.bf16 %v3106, %v3106
    %v3109 = vpack.c.bf16 %v3107, %v3107
    %v3110 = vunpack.c.l.bf16 %v3108
    %v3111 = vunpack.c.l.bf16 %v3109
    %v3112 = vmax.f32 %v3104, %v3110
    %v3113 = vmax.f32 %v3105, %v3111
    %v3114 = vpack.c.bf16 %v3113, %v3112
    %v3115 = vld [vmem:[#allocation13] sm:$0xf]
    %v3116 = vld [vmem:[#allocation13 + $0x4] sm:$0xf]
    %v3117 = vld [vmem:[#allocation13 + $0x8] sm:$0xf]
    %v3118 = vld [vmem:[#allocation13 + $0xc] sm:$0xf]
    %v3119 = vld [vmem:[#allocation13 + $0x10] sm:$0xf]
    %v3120 = vld [vmem:[#allocation13 + $0x14] sm:$0xf]
    %v3121 = vld [vmem:[#allocation13 + $0x18] sm:$0xf]
    %v3122 = vld [vmem:[#allocation13 + $0x1c] sm:$0xf]
    %v3123 = vld [vmem:[#allocation13 + $0x20] sm:$0xf]
    %v3124 = vld [vmem:[#allocation13 + $0x24] sm:$0xf]
    %v3125 = vld [vmem:[#allocation13 + $0x28] sm:$0xf]
    %v3126 = vld [vmem:[#allocation13 + $0x2c] sm:$0xf]
    %v3127 = vld [vmem:[#allocation13 + $0x30] sm:$0xf]
    %v3128 = vld [vmem:[#allocation13 + $0x34] sm:$0xf]
    %v3129 = vld [vmem:[#allocation13 + $0x38] sm:$0xf]
    %v3130 = vld [vmem:[#allocation13 + $0x3c] sm:$0xf]
    %v3131 = vld [vmem:[%s8] sm:$0x1]
    %v3133 = vperm.slane %v3131, 0
    %v3151 = vunpack.c.l.b16 %v3115
    %v3152 = vunpack.c.l.b16 %v3116
    %v3153 = vunpack.c.l.b16 %v3117
    %v3154 = vunpack.c.l.b16 %v3118
    %v3155 = vunpack.c.l.b16 %v3119
    %v3156 = vunpack.c.l.b16 %v3120
    %v3157 = vunpack.c.l.b16 %v3121
    %v3158 = vunpack.c.l.b16 %v3122
    %v3159 = vunpack.c.l.b16 %v3123
    %v3160 = vunpack.c.l.b16 %v3124
    %v3161 = vunpack.c.l.b16 %v3125
    %v3162 = vunpack.c.l.b16 %v3126
    %v3163 = vunpack.c.l.b16 %v3127
    %v3164 = vunpack.c.l.b16 %v3128
    %v3165 = vunpack.c.l.b16 %v3129
    %v3166 = vunpack.c.l.b16 %v3130
    %v3167 = vpack.c.b16 %v3152, %v3151
    %v3168 = vpack.c.b16 %v3154, %v3153
    %v3169 = vpack.c.b16 %v3156, %v3155
    %v3170 = vpack.c.b16 %v3158, %v3157
    %v3171 = vpack.c.b16 %v3160, %v3159
    %v3172 = vpack.c.b16 %v3162, %v3161
    %v3173 = vpack.c.b16 %v3164, %v3163
    %v3174 = vpack.c.b16 %v3166, %v3165
    %3183 = vmatpush.bf16.msra.mxu0 %v3174
    %3184 = vmatpush.bf16.msra.mxu0 %v3173
    %3185 = vmatpush.bf16.msra.mxu0 %v3172
    %3186 = vmatpush.bf16.msra.mxu0 %v3171
    %3187 = vmatpush.bf16.msra.mxu0 %v3170
    %3188 = vmatpush.bf16.msra.mxu0 %v3169
    %3189 = vmatpush.bf16.msra.mxu0 %v3168
    %3190 = vmatpush.bf16.msra.mxu0 %v3167
    %3191 = vmatmul.bf16.gmra.mxu0 %v3114
    %v3192 = vpop.f32.mrf.mxu0
    %v3193 = vadd.f32 %v3133, %v3192
    %v3194 = vpop.f32.mrf.mxu0
    %v3195 = vadd.f32 %v3133, %v3194
    %3196 = vdwg.mxu0
    %3197 = vst [vmem:[#allocation14] sm:$0xff] %v3193
    %3198 = vst [vmem:[#allocation14 + $0x8] sm:$0xff] %v3195
    // Predicated region
    $region66: #{tpu_custom_call.1} parent=1 // pred_check
      _
    $region67: #{tpu_custom_call.1} parent=1 // pred_check_branch
      %3200 = sbr.rel (0) target = $region69
    $region68: #{tpu_custom_call.1} parent=1 // pred_region
      %3202 = vsyncadd [#allocation4], 0
      %s3203 = sshll.u32 [#allocation14], 4
      %s3204 = int_to_ptr.vmem [resolvable:$true] %s3203
      %s3205 = sshll.u32 %s9, 4
      %s3206 = int_to_ptr.hbm [resolvable:$true] %s3205
      %3211 = dma.vmem_to_hbm [thread:$0]  %s3204, 256, %s3206, [#allocation4], 128, 128, 8
    $region69: #{tpu_custom_call.1} parent=1 // pred_fallthru
      _
    // Predicated region
    $region70: #{tpu_custom_call.1} parent=1 // pred_check
      _
    $region71: #{tpu_custom_call.1} parent=1 // pred_check_branch
      %3213 = sbr.rel (0) target = $region73
    $region72: #{tpu_custom_call.1} parent=1 // pred_region
      %3215 = dma.done [#allocation4], 256
    $region73: #{tpu_custom_call.1} parent=1 // pred_fallthru
      _
    %3216 = vsyncpa [#allocation3], 1
    %3217 = vsyncpa [#allocation6], 1
    %3218 = vsyncpa [#allocation9], 1
    %3219 = vsyncpa [#allocation12], 1
    %3220 = vsyncpa [#allocation4], 1

</llo_original>
